<compile_context>
chip_gen: v5e
topology: v5e:2x2
jax: 0.10.0
libtpu: 0.0.40
codegen_flags: <defaults>
</compile_context>

<pallas_src>
import jax
import jax.numpy as jnp
from jax.experimental import pallas as pl
from jax.experimental.pallas import tpu as pltpu


# ----------------------------------------------------------------------------
# Fused encoder kernel.
# ----------------------------------------------------------------------------
def encoder_kernel(tok_ref, emb_ref,
                   cw0_ref, cb0_ref, cw1_ref, cb1_ref, cw2_ref, cb2_ref,
                   wihf_ref, wihb_ref, bih_ref, wblk_ref, bhh_ref,
                   wlin_ref, blin_ref,
                   out_ref, hidden_ref,
                   xp_ref):
    B, T, H2 = out_ref.shape          # H2 = 2 * H
    H = H2 // 2
    TB = T * B
    NS = emb_ref.shape[0]
    K = cw0_ref.shape[0]
    C = cw0_ref.shape[2]
    padB = ((K - 1) // 2) * B

    # ---- Embedding lookup as a one-hot matmul (exact, MXU-friendly) --------
    tok = tok_ref[...]                                        # (TB, 1) int32
    iota = jax.lax.broadcasted_iota(jnp.int32, (TB, NS), 1)
    onehot = (iota == tok).astype(jnp.float32)                # (TB, NS)
    x = jnp.dot(onehot, emb_ref[...],
                preferred_element_type=jnp.float32)           # (TB, E) time-major

    # ---- Conv1d('same') + folded BN + ReLU: per-tap matmuls on a padded
    #      time-major VMEM scratch (pad rows zeroed once, never rewritten) ---
    xp_ref[...] = jnp.zeros_like(xp_ref)

    def conv_bn_relu(x2d, w_ref, b_ref):
        xp_ref[padB:padB + TB, :] = x2d                       # middle rows only
        xp = xp_ref[...]                                      # (Tp*B, C) f32
        acc = jnp.dot(xp[0:TB, :].astype(jnp.bfloat16), w_ref[0],
                      preferred_element_type=jnp.float32)
        for k in range(1, K):
            acc = acc + jnp.dot(
                xp[k * B:k * B + TB, :].astype(jnp.bfloat16), w_ref[k],
                preferred_element_type=jnp.float32)
        return jnp.maximum(acc + b_ref[...], 0.0)             # (TB, C)

    x = conv_bn_relu(x, cw0_ref, cb0_ref)
    x = conv_bn_relu(x, cw1_ref, cb1_ref)
    x = conv_bn_relu(x, cw2_ref, cb2_ref)

    # ---- BiGRU: input projections hoisted out of the recurrence ------------
    # wihf/wihb are gate-interleaved with zeros in the other direction's
    # columns, so gi_f + gi_b (at the right timesteps) is already in the
    # [r_f r_b | z_f z_b | n_f n_b] layout of the merged recurrent matmul.
    xb = x.astype(jnp.bfloat16)
    gi_f = jnp.dot(xb, wihf_ref[...],
                   preferred_element_type=jnp.float32) + bih_ref[...]  # (TB, 6H)
    gi_b = jnp.dot(xb, wihb_ref[...],
                   preferred_element_type=jnp.float32)                 # (TB, 6H)

    wblk = wblk_ref[...]                                      # (2H, 6H) f32
    bhh = bhh_ref[...]                                        # (1, 6H)

    # Merged fwd/bwd recurrence: ONE (B,2H)@(2H,6H) matmul per step; outputs
    # stored per step directly into out_ref.
    # TODO(synk): for long sequences switch to lax.fori_loop over time-major
    #             VMEM scratch instead of the static unroll.
    h_cat = jnp.zeros((B, H2), jnp.float32)                   # [h_f | h_b]
    for t in range(T):
        tb = T - 1 - t
        gi = gi_f[t * B:(t + 1) * B, :] + gi_b[tb * B:(tb + 1) * B, :]
        gh = jnp.dot(h_cat, wblk, preferred_element_type=jnp.float32) + bhh
        r = jax.nn.sigmoid(gi[:, 0:H2] + gh[:, 0:H2])
        z = jax.nn.sigmoid(gi[:, H2:2 * H2] + gh[:, H2:2 * H2])
        n = jnp.tanh(gi[:, 2 * H2:] + r * gh[:, 2 * H2:])
        h_cat = (1.0 - z) * n + z * h_cat
        out_ref[:, t:t + 1, 0:H] = h_cat[:, None, 0:H]
        out_ref[:, tb:tb + 1, H:H2] = h_cat[:, None, H:H2]

    # hidden = tanh(Linear(concat(h_fwd_final, h_bwd_final)))
    hidden_ref[...] = jnp.tanh(
        jnp.dot(h_cat, wlin_ref[...], preferred_element_type=jnp.float32)
        + blin_ref[...])


def encoder_fused(tok_tm, params, B, T):
    NS, E = params["embedding"].shape
    K, cin0, C = params["cw0"].shape
    H = C // 2
    D = params["wlin"].shape[1]
    assert K % 2 == 1, "'same' padding requires odd kernel_size"
    assert E == C == cin0, "module chains convs: embedding_dim == channels"
    Tp = T + K - 1

    vmem = pl.BlockSpec(memory_space=pltpu.MemorySpace.VMEM)
    args = (
        tok_tm, params["embedding"],
        params["cw0"], params["cb0"],
        params["cw1"], params["cb1"],
        params["cw2"], params["cb2"],
        params["wih_f_il"], params["wih_b_il"], params["bih_cat"],
        params["wblk"], params["bhh_cat"],
        params["wlin"], params["blin"],
    )
    return pl.pallas_call(
        encoder_kernel,
        out_shape=(
            jax.ShapeDtypeStruct((B, T, 2 * H), jnp.float32),
            jax.ShapeDtypeStruct((B, D), jnp.float32),
        ),
        in_specs=[vmem] * len(args),
        out_specs=(vmem, vmem),
        scratch_shapes=[pltpu.VMEM((Tp * B, C), jnp.float32)],
    )(*args)


# ----------------------------------------------------------------------------
# Encoder forward. Only wrapper op is a 64-byte token transpose (time-major
# order so all in-kernel slices are contiguous leading-row windows).
# ----------------------------------------------------------------------------
@jax.jit
def encoder_forward(tokens, params):
    B, T = tokens.shape
    tok_tm = tokens.T.reshape(T * B, 1).astype(jnp.int32)
    return encoder_fused(tok_tm, params, B, T)


# ----------------------------------------------------------------------------
# Deterministic synthetic parameters (PyTorch-equivalent layouts folded at
# init into the fused kernel's layouts).
# ----------------------------------------------------------------------------
def make_params(key, num_symbols, embedding_dim, out_channels, kernel_size,
                decoder_dim):
    C = out_channels
    H = C // 2
    K = kernel_size
    assert K % 2 == 1
    keys = jax.random.split(key, 40)
    ki = iter(keys)

    def rnd(shape, scale=0.1):
        return (scale * jax.random.normal(next(ki), shape)).astype(jnp.float32)

    params = {"embedding": rnd((num_symbols, embedding_dim), 0.5)}

    # Convs: PyTorch weight (Cout, Cin, K) stored tap-major as (K, Cin, Cout)
    # with the eval-mode BatchNorm scale folded into the weight and the shift
    # (incl. conv bias) kept as a per-channel bias.  Weights in bf16.
    eps = 1e-5
    running_mean = jnp.zeros((C,), jnp.float32)
    running_var = jnp.ones((C,), jnp.float32)
    for i in range(3):
        cin = embedding_dim if i == 0 else C
        w = rnd((K, cin, C))
        conv_b = rnd((C,))
        gamma = 1.0 + rnd((C,))
        beta = rnd((C,))
        scale = gamma / jnp.sqrt(running_var + eps)
        shift = beta + (conv_b - running_mean) * scale
        params[f"cw{i}"] = (w * scale[None, None, :]).astype(jnp.bfloat16)
        params[f"cb{i}"] = shift.reshape(1, C)

    def gate_interleave(m_f, m_b):
        # (..., 3H) x2 -> (..., 6H) ordered [r_f r_b | z_f z_b | n_f n_b]
        parts = []
        for g in range(3):
            parts.append(m_f[..., g * H:(g + 1) * H])
            parts.append(m_b[..., g * H:(g + 1) * H])
        return jnp.concatenate(parts, axis=-1)

    # GRU per-direction weights (PyTorch layout, pre-transposed): wih (C,3H),
    # whh (H,3H), gate order r,z,n.
    wih_f = rnd((C, 3 * H)); whh_f = rnd((H, 3 * H))
    bih_f = rnd((1, 3 * H)); bhh_f = rnd((1, 3 * H))
    wih_b = rnd((C, 3 * H)); whh_b = rnd((H, 3 * H))
    bih_b = rnd((1, 3 * H)); bhh_b = rnd((1, 3 * H))

    zC = jnp.zeros((C, 3 * H), jnp.float32)
    zH = jnp.zeros((H, 3 * H), jnp.float32)
    # Zero-padded, gate-interleaved input projections (bf16, off serial path).
    params["wih_f_il"] = gate_interleave(wih_f, zC).astype(jnp.bfloat16)
    params["wih_b_il"] = gate_interleave(zC, wih_b).astype(jnp.bfloat16)
    params["bih_cat"] = gate_interleave(bih_f, bih_b)
    # Block-diagonal, gate-interleaved recurrent weight (f32, serial path).
    params["wblk"] = gate_interleave(
        jnp.concatenate([whh_f, zH], axis=0),
        jnp.concatenate([zH, whh_b], axis=0))                 # (2H, 6H)
    params["bhh_cat"] = gate_interleave(bhh_f, bhh_b)

    # Linear: PyTorch (decoder_dim, 2H) stored as (2H, decoder_dim).
    params["wlin"] = rnd((2 * H, decoder_dim))
    params["blin"] = rnd((1, decoder_dim))
    return params


if __name__ == "__main__":
    NUM_SYMBOLS = 40       # stand-in for len(symbols)
    EMBEDDING_DIM = 32
    OUT_CHANNELS = 32      # must equal EMBEDDING_DIM (module chains the convs)
    KERNEL_SIZE = 5
    DECODER_DIM = 32
    B, T = 2, 8

    key = jax.random.PRNGKey(0)
    pkey, tkey = jax.random.split(key)
    params = make_params(pkey, NUM_SYMBOLS, EMBEDDING_DIM, OUT_CHANNELS,
                         KERNEL_SIZE, DECODER_DIM)
    tokens = jax.random.randint(tkey, (B, T), 0, NUM_SYMBOLS, dtype=jnp.int32)

    outputs, hidden = encoder_forward(tokens, params)
    jax.block_until_ready((outputs, hidden))

    assert outputs.shape == (B, T, OUT_CHANNELS)
    assert hidden.shape == (B, DECODER_DIM)
    print("KERNEL_OK")
</pallas_src>

<mosaic_0001>
module attributes {stable_mosaic.version = 11 : i64} {
  func.func @encoder_kernel(%arg0: memref<16x1xi32, #tpu.memory_space<vmem>>, %arg1: memref<40x32xf32, #tpu.memory_space<vmem>>, %arg2: memref<5x32x32xbf16, #tpu.memory_space<vmem>>, %arg3: memref<1x32xf32, #tpu.memory_space<vmem>>, %arg4: memref<5x32x32xbf16, #tpu.memory_space<vmem>>, %arg5: memref<1x32xf32, #tpu.memory_space<vmem>>, %arg6: memref<5x32x32xbf16, #tpu.memory_space<vmem>>, %arg7: memref<1x32xf32, #tpu.memory_space<vmem>>, %arg8: memref<32x96xbf16, #tpu.memory_space<vmem>>, %arg9: memref<32x96xbf16, #tpu.memory_space<vmem>>, %arg10: memref<1x96xf32, #tpu.memory_space<vmem>>, %arg11: memref<32x96xf32, #tpu.memory_space<vmem>>, %arg12: memref<1x96xf32, #tpu.memory_space<vmem>>, %arg13: memref<32x32xf32, #tpu.memory_space<vmem>>, %arg14: memref<1x32xf32, #tpu.memory_space<vmem>>, %arg15: memref<2x8x32xf32, #tpu.memory_space<vmem>>, %arg16: memref<2x32xf32, #tpu.memory_space<vmem>>, %arg17: memref<24x32xf32, #tpu.memory_space<vmem>>) attributes {dimension_semantics = [], scalar_prefetch = 0 : i64, scratch_operands = 1 : i64, tpu.core_type = #tpu.core_type<tc>} {
    %c0 = arith.constant 0 : index
    %c0_0 = arith.constant 0 : index
    %0 = vector.load %arg0[%c0, %c0_0] : memref<16x1xi32, #tpu.memory_space<vmem>>, vector<16x1xi32>
    %1 = tpu.iota {dimensions = array<i32: 1>} : vector<16x40xi32>
    %2 = vector.broadcast %0 : vector<16x1xi32> to vector<16x40xi32>
    %3 = arith.cmpi eq, %1, %2 : vector<16x40xi32>
    %4 = arith.extui %3 : vector<16x40xi1> to vector<16x40xi32>
    %5 = arith.sitofp %4 : vector<16x40xi32> to vector<16x40xf32>
    %c0_1 = arith.constant 0 : index
    %c0_2 = arith.constant 0 : index
    %6 = vector.load %arg1[%c0_1, %c0_2] : memref<40x32xf32, #tpu.memory_space<vmem>>, vector<40x32xf32>
    %cst = arith.constant dense<0.000000e+00> : vector<16x32xf32>
    %7 = tpu.matmul %5, %6, %cst {dimension_numbers = #tpu.dot_dimension_numbers<[1], [0], [0], [1], [0, 0, 1, 1], [], []>} : vector<16x40xf32>, vector<40x32xf32>, vector<16x32xf32> -> vector<16x32xf32>
    %cst_3 = arith.constant 0.000000e+00 : f32
    %8 = vector.broadcast %cst_3 : f32 to vector<24x32xf32>
    %c0_4 = arith.constant 0 : index
    %c0_5 = arith.constant 0 : index
    %9 = vector.load %arg17[%c0_4, %c0_5] : memref<24x32xf32, #tpu.memory_space<vmem>>, vector<24x32xf32>
    tpu.vector_store %arg17[%c0_4, %c0_5], %8 {strides = array<i32>} : memref<24x32xf32, #tpu.memory_space<vmem>>, vector<24x32xf32>,
    %c4 = arith.constant 4 : index
    %c0_6 = arith.constant 0 : index
    %10 = vector.load %arg17[%c4, %c0_6] : memref<24x32xf32, #tpu.memory_space<vmem>>, vector<16x32xf32>
    tpu.vector_store %arg17[%c4, %c0_6], %7 {strides = array<i32>} : memref<24x32xf32, #tpu.memory_space<vmem>>, vector<16x32xf32>,
    %c0_7 = arith.constant 0 : index
    %c0_8 = arith.constant 0 : index
    %11 = vector.load %arg17[%c0_7, %c0_8] : memref<24x32xf32, #tpu.memory_space<vmem>>, vector<24x32xf32>
    %12 = vector.extract_strided_slice %11 {offsets = [0, 0], sizes = [16, 32], strides = [1, 1]} : vector<24x32xf32> to vector<16x32xf32>
    %13 = arith.truncf %12 : vector<16x32xf32> to vector<16x32xbf16>
    %c0_9 = arith.constant 0 : index
    %c0_10 = arith.constant 0 : index
    %c0_11 = arith.constant 0 : index
    %14 = vector.load %arg2[%c0_9, %c0_10, %c0_11] : memref<5x32x32xbf16, #tpu.memory_space<vmem>>, vector<1x32x32xbf16>
    %15 = vector.shape_cast %14 : vector<1x32x32xbf16> to vector<32x32xbf16>
    %cst_12 = arith.constant dense<0.000000e+00> : vector<16x32xf32>
    %16 = tpu.matmul %13, %15, %cst_12 {dimension_numbers = #tpu.dot_dimension_numbers<[1], [0], [0], [1], [0, 0, 1, 1], [], []>} : vector<16x32xbf16>, vector<32x32xbf16>, vector<16x32xf32> -> vector<16x32xf32>
    %17 = vector.extract_strided_slice %11 {offsets = [2, 0], sizes = [16, 32], strides = [1, 1]} : vector<24x32xf32> to vector<16x32xf32>
    %18 = arith.truncf %17 : vector<16x32xf32> to vector<16x32xbf16>
    %c1 = arith.constant 1 : index
    %c0_13 = arith.constant 0 : index
    %c0_14 = arith.constant 0 : index
    %19 = vector.load %arg2[%c1, %c0_13, %c0_14] : memref<5x32x32xbf16, #tpu.memory_space<vmem>>, vector<1x32x32xbf16>
    %20 = vector.shape_cast %19 : vector<1x32x32xbf16> to vector<32x32xbf16>
    %cst_15 = arith.constant dense<0.000000e+00> : vector<16x32xf32>
    %21 = tpu.matmul %18, %20, %cst_15 {dimension_numbers = #tpu.dot_dimension_numbers<[1], [0], [0], [1], [0, 0, 1, 1], [], []>} : vector<16x32xbf16>, vector<32x32xbf16>, vector<16x32xf32> -> vector<16x32xf32>
    %22 = arith.addf %16, %21 : vector<16x32xf32>
    %23 = vector.extract_strided_slice %11 {offsets = [4, 0], sizes = [16, 32], strides = [1, 1]} : vector<24x32xf32> to vector<16x32xf32>
    %24 = arith.truncf %23 : vector<16x32xf32> to vector<16x32xbf16>
    %c2 = arith.constant 2 : index
    %c0_16 = arith.constant 0 : index
    %c0_17 = arith.constant 0 : index
    %25 = vector.load %arg2[%c2, %c0_16, %c0_17] : memref<5x32x32xbf16, #tpu.memory_space<vmem>>, vector<1x32x32xbf16>
    %26 = vector.shape_cast %25 : vector<1x32x32xbf16> to vector<32x32xbf16>
    %cst_18 = arith.constant dense<0.000000e+00> : vector<16x32xf32>
    %27 = tpu.matmul %24, %26, %cst_18 {dimension_numbers = #tpu.dot_dimension_numbers<[1], [0], [0], [1], [0, 0, 1, 1], [], []>} : vector<16x32xbf16>, vector<32x32xbf16>, vector<16x32xf32> -> vector<16x32xf32>
    %28 = arith.addf %22, %27 : vector<16x32xf32>
    %29 = vector.extract_strided_slice %11 {offsets = [6, 0], sizes = [16, 32], strides = [1, 1]} : vector<24x32xf32> to vector<16x32xf32>
    %30 = arith.truncf %29 : vector<16x32xf32> to vector<16x32xbf16>
    %c3 = arith.constant 3 : index
    %c0_19 = arith.constant 0 : index
    %c0_20 = arith.constant 0 : index
    %31 = vector.load %arg2[%c3, %c0_19, %c0_20] : memref<5x32x32xbf16, #tpu.memory_space<vmem>>, vector<1x32x32xbf16>
    %32 = vector.shape_cast %31 : vector<1x32x32xbf16> to vector<32x32xbf16>
    %cst_21 = arith.constant dense<0.000000e+00> : vector<16x32xf32>
    %33 = tpu.matmul %30, %32, %cst_21 {dimension_numbers = #tpu.dot_dimension_numbers<[1], [0], [0], [1], [0, 0, 1, 1], [], []>} : vector<16x32xbf16>, vector<32x32xbf16>, vector<16x32xf32> -> vector<16x32xf32>
    %34 = arith.addf %28, %33 : vector<16x32xf32>
    %35 = vector.extract_strided_slice %11 {offsets = [8, 0], sizes = [16, 32], strides = [1, 1]} : vector<24x32xf32> to vector<16x32xf32>
    %36 = arith.truncf %35 : vector<16x32xf32> to vector<16x32xbf16>
    %c4_22 = arith.constant 4 : index
    %c0_23 = arith.constant 0 : index
    %c0_24 = arith.constant 0 : index
    %37 = vector.load %arg2[%c4_22, %c0_23, %c0_24] : memref<5x32x32xbf16, #tpu.memory_space<vmem>>, vector<1x32x32xbf16>
    %38 = vector.shape_cast %37 : vector<1x32x32xbf16> to vector<32x32xbf16>
    %cst_25 = arith.constant dense<0.000000e+00> : vector<16x32xf32>
    %39 = tpu.matmul %36, %38, %cst_25 {dimension_numbers = #tpu.dot_dimension_numbers<[1], [0], [0], [1], [0, 0, 1, 1], [], []>} : vector<16x32xbf16>, vector<32x32xbf16>, vector<16x32xf32> -> vector<16x32xf32>
    %40 = arith.addf %34, %39 : vector<16x32xf32>
    %c0_26 = arith.constant 0 : index
    %c0_27 = arith.constant 0 : index
    %41 = vector.load %arg3[%c0_26, %c0_27] : memref<1x32xf32, #tpu.memory_space<vmem>>, vector<1x32xf32>
    %42 = vector.broadcast %41 : vector<1x32xf32> to vector<16x32xf32>
    %43 = arith.addf %40, %42 : vector<16x32xf32>
    %cst_28 = arith.constant 0.000000e+00 : f32
    %44 = vector.broadcast %cst_28 : f32 to vector<16x32xf32>
    %45 = arith.maximumf %43, %44 : vector<16x32xf32>
    %c4_29 = arith.constant 4 : index
    %c0_30 = arith.constant 0 : index
    %46 = vector.load %arg17[%c4_29, %c0_30] : memref<24x32xf32, #tpu.memory_space<vmem>>, vector<16x32xf32>
    tpu.vector_store %arg17[%c4_29, %c0_30], %45 {strides = array<i32>} : memref<24x32xf32, #tpu.memory_space<vmem>>, vector<16x32xf32>,
    %c0_31 = arith.constant 0 : index
    %c0_32 = arith.constant 0 : index
    %47 = vector.load %arg17[%c0_31, %c0_32] : memref<24x32xf32, #tpu.memory_space<vmem>>, vector<24x32xf32>
    %48 = vector.extract_strided_slice %47 {offsets = [0, 0], sizes = [16, 32], strides = [1, 1]} : vector<24x32xf32> to vector<16x32xf32>
    %49 = arith.truncf %48 : vector<16x32xf32> to vector<16x32xbf16>
    %c0_33 = arith.constant 0 : index
    %c0_34 = arith.constant 0 : index
    %c0_35 = arith.constant 0 : index
    %50 = vector.load %arg4[%c0_33, %c0_34, %c0_35] : memref<5x32x32xbf16, #tpu.memory_space<vmem>>, vector<1x32x32xbf16>
    %51 = vector.shape_cast %50 : vector<1x32x32xbf16> to vector<32x32xbf16>
    %cst_36 = arith.constant dense<0.000000e+00> : vector<16x32xf32>
    %52 = tpu.matmul %49, %51, %cst_36 {dimension_numbers = #tpu.dot_dimension_numbers<[1], [0], [0], [1], [0, 0, 1, 1], [], []>} : vector<16x32xbf16>, vector<32x32xbf16>, vector<16x32xf32> -> vector<16x32xf32>
    %53 = vector.extract_strided_slice %47 {offsets = [2, 0], sizes = [16, 32], strides = [1, 1]} : vector<24x32xf32> to vector<16x32xf32>
    %54 = arith.truncf %53 : vector<16x32xf32> to vector<16x32xbf16>
    %c1_37 = arith.constant 1 : index
    %c0_38 = arith.constant 0 : index
    %c0_39 = arith.constant 0 : index
    %55 = vector.load %arg4[%c1_37, %c0_38, %c0_39] : memref<5x32x32xbf16, #tpu.memory_space<vmem>>, vector<1x32x32xbf16>
    %56 = vector.shape_cast %55 : vector<1x32x32xbf16> to vector<32x32xbf16>
    %cst_40 = arith.constant dense<0.000000e+00> : vector<16x32xf32>
    %57 = tpu.matmul %54, %56, %cst_40 {dimension_numbers = #tpu.dot_dimension_numbers<[1], [0], [0], [1], [0, 0, 1, 1], [], []>} : vector<16x32xbf16>, vector<32x32xbf16>, vector<16x32xf32> -> vector<16x32xf32>
    %58 = arith.addf %52, %57 : vector<16x32xf32>
    %59 = vector.extract_strided_slice %47 {offsets = [4, 0], sizes = [16, 32], strides = [1, 1]} : vector<24x32xf32> to vector<16x32xf32>
    %60 = arith.truncf %59 : vector<16x32xf32> to vector<16x32xbf16>
    %c2_41 = arith.constant 2 : index
    %c0_42 = arith.constant 0 : index
    %c0_43 = arith.constant 0 : index
    %61 = vector.load %arg4[%c2_41, %c0_42, %c0_43] : memref<5x32x32xbf16, #tpu.memory_space<vmem>>, vector<1x32x32xbf16>
    %62 = vector.shape_cast %61 : vector<1x32x32xbf16> to vector<32x32xbf16>
    %cst_44 = arith.constant dense<0.000000e+00> : vector<16x32xf32>
    %63 = tpu.matmul %60, %62, %cst_44 {dimension_numbers = #tpu.dot_dimension_numbers<[1], [0], [0], [1], [0, 0, 1, 1], [], []>} : vector<16x32xbf16>, vector<32x32xbf16>, vector<16x32xf32> -> vector<16x32xf32>
    %64 = arith.addf %58, %63 : vector<16x32xf32>
    %65 = vector.extract_strided_slice %47 {offsets = [6, 0], sizes = [16, 32], strides = [1, 1]} : vector<24x32xf32> to vector<16x32xf32>
    %66 = arith.truncf %65 : vector<16x32xf32> to vector<16x32xbf16>
    %c3_45 = arith.constant 3 : index
    %c0_46 = arith.constant 0 : index
    %c0_47 = arith.constant 0 : index
    %67 = vector.load %arg4[%c3_45, %c0_46, %c0_47] : memref<5x32x32xbf16, #tpu.memory_space<vmem>>, vector<1x32x32xbf16>
    %68 = vector.shape_cast %67 : vector<1x32x32xbf16> to vector<32x32xbf16>
    %cst_48 = arith.constant dense<0.000000e+00> : vector<16x32xf32>
    %69 = tpu.matmul %66, %68, %cst_48 {dimension_numbers = #tpu.dot_dimension_numbers<[1], [0], [0], [1], [0, 0, 1, 1], [], []>} : vector<16x32xbf16>, vector<32x32xbf16>, vector<16x32xf32> -> vector<16x32xf32>
    %70 = arith.addf %64, %69 : vector<16x32xf32>
    %71 = vector.extract_strided_slice %47 {offsets = [8, 0], sizes = [16, 32], strides = [1, 1]} : vector<24x32xf32> to vector<16x32xf32>
    %72 = arith.truncf %71 : vector<16x32xf32> to vector<16x32xbf16>
    %c4_49 = arith.constant 4 : index
    %c0_50 = arith.constant 0 : index
    %c0_51 = arith.constant 0 : index
    %73 = vector.load %arg4[%c4_49, %c0_50, %c0_51] : memref<5x32x32xbf16, #tpu.memory_space<vmem>>, vector<1x32x32xbf16>
    %74 = vector.shape_cast %73 : vector<1x32x32xbf16> to vector<32x32xbf16>
    %cst_52 = arith.constant dense<0.000000e+00> : vector<16x32xf32>
    %75 = tpu.matmul %72, %74, %cst_52 {dimension_numbers = #tpu.dot_dimension_numbers<[1], [0], [0], [1], [0, 0, 1, 1], [], []>} : vector<16x32xbf16>, vector<32x32xbf16>, vector<16x32xf32> -> vector<16x32xf32>
    %76 = arith.addf %70, %75 : vector<16x32xf32>
    %c0_53 = arith.constant 0 : index
    %c0_54 = arith.constant 0 : index
    %77 = vector.load %arg5[%c0_53, %c0_54] : memref<1x32xf32, #tpu.memory_space<vmem>>, vector<1x32xf32>
    %78 = vector.broadcast %77 : vector<1x32xf32> to vector<16x32xf32>
    %79 = arith.addf %76, %78 : vector<16x32xf32>
    %cst_55 = arith.constant 0.000000e+00 : f32
    %80 = vector.broadcast %cst_55 : f32 to vector<16x32xf32>
    %81 = arith.maximumf %79, %80 : vector<16x32xf32>
    %c4_56 = arith.constant 4 : index
    %c0_57 = arith.constant 0 : index
    %82 = vector.load %arg17[%c4_56, %c0_57] : memref<24x32xf32, #tpu.memory_space<vmem>>, vector<16x32xf32>
    tpu.vector_store %arg17[%c4_56, %c0_57], %81 {strides = array<i32>} : memref<24x32xf32, #tpu.memory_space<vmem>>, vector<16x32xf32>,
    %c0_58 = arith.constant 0 : index
    %c0_59 = arith.constant 0 : index
    %83 = vector.load %arg17[%c0_58, %c0_59] : memref<24x32xf32, #tpu.memory_space<vmem>>, vector<24x32xf32>
    %84 = vector.extract_strided_slice %83 {offsets = [0, 0], sizes = [16, 32], strides = [1, 1]} : vector<24x32xf32> to vector<16x32xf32>
    %85 = arith.truncf %84 : vector<16x32xf32> to vector<16x32xbf16>
    %c0_60 = arith.constant 0 : index
    %c0_61 = arith.constant 0 : index
    %c0_62 = arith.constant 0 : index
    %86 = vector.load %arg6[%c0_60, %c0_61, %c0_62] : memref<5x32x32xbf16, #tpu.memory_space<vmem>>, vector<1x32x32xbf16>
    %87 = vector.shape_cast %86 : vector<1x32x32xbf16> to vector<32x32xbf16>
    %cst_63 = arith.constant dense<0.000000e+00> : vector<16x32xf32>
    %88 = tpu.matmul %85, %87, %cst_63 {dimension_numbers = #tpu.dot_dimension_numbers<[1], [0], [0], [1], [0, 0, 1, 1], [], []>} : vector<16x32xbf16>, vector<32x32xbf16>, vector<16x32xf32> -> vector<16x32xf32>
    %89 = vector.extract_strided_slice %83 {offsets = [2, 0], sizes = [16, 32], strides = [1, 1]} : vector<24x32xf32> to vector<16x32xf32>
    %90 = arith.truncf %89 : vector<16x32xf32> to vector<16x32xbf16>
    %c1_64 = arith.constant 1 : index
    %c0_65 = arith.constant 0 : index
    %c0_66 = arith.constant 0 : index
    %91 = vector.load %arg6[%c1_64, %c0_65, %c0_66] : memref<5x32x32xbf16, #tpu.memory_space<vmem>>, vector<1x32x32xbf16>
    %92 = vector.shape_cast %91 : vector<1x32x32xbf16> to vector<32x32xbf16>
    %cst_67 = arith.constant dense<0.000000e+00> : vector<16x32xf32>
    %93 = tpu.matmul %90, %92, %cst_67 {dimension_numbers = #tpu.dot_dimension_numbers<[1], [0], [0], [1], [0, 0, 1, 1], [], []>} : vector<16x32xbf16>, vector<32x32xbf16>, vector<16x32xf32> -> vector<16x32xf32>
    %94 = arith.addf %88, %93 : vector<16x32xf32>
    %95 = vector.extract_strided_slice %83 {offsets = [4, 0], sizes = [16, 32], strides = [1, 1]} : vector<24x32xf32> to vector<16x32xf32>
    %96 = arith.truncf %95 : vector<16x32xf32> to vector<16x32xbf16>
    %c2_68 = arith.constant 2 : index
    %c0_69 = arith.constant 0 : index
    %c0_70 = arith.constant 0 : index
    %97 = vector.load %arg6[%c2_68, %c0_69, %c0_70] : memref<5x32x32xbf16, #tpu.memory_space<vmem>>, vector<1x32x32xbf16>
    %98 = vector.shape_cast %97 : vector<1x32x32xbf16> to vector<32x32xbf16>
    %cst_71 = arith.constant dense<0.000000e+00> : vector<16x32xf32>
    %99 = tpu.matmul %96, %98, %cst_71 {dimension_numbers = #tpu.dot_dimension_numbers<[1], [0], [0], [1], [0, 0, 1, 1], [], []>} : vector<16x32xbf16>, vector<32x32xbf16>, vector<16x32xf32> -> vector<16x32xf32>
    %100 = arith.addf %94, %99 : vector<16x32xf32>
    %101 = vector.extract_strided_slice %83 {offsets = [6, 0], sizes = [16, 32], strides = [1, 1]} : vector<24x32xf32> to vector<16x32xf32>
    %102 = arith.truncf %101 : vector<16x32xf32> to vector<16x32xbf16>
    %c3_72 = arith.constant 3 : index
    %c0_73 = arith.constant 0 : index
    %c0_74 = arith.constant 0 : index
    %103 = vector.load %arg6[%c3_72, %c0_73, %c0_74] : memref<5x32x32xbf16, #tpu.memory_space<vmem>>, vector<1x32x32xbf16>
    %104 = vector.shape_cast %103 : vector<1x32x32xbf16> to vector<32x32xbf16>
    %cst_75 = arith.constant dense<0.000000e+00> : vector<16x32xf32>
    %105 = tpu.matmul %102, %104, %cst_75 {dimension_numbers = #tpu.dot_dimension_numbers<[1], [0], [0], [1], [0, 0, 1, 1], [], []>} : vector<16x32xbf16>, vector<32x32xbf16>, vector<16x32xf32> -> vector<16x32xf32>
    %106 = arith.addf %100, %105 : vector<16x32xf32>
    %107 = vector.extract_strided_slice %83 {offsets = [8, 0], sizes = [16, 32], strides = [1, 1]} : vector<24x32xf32> to vector<16x32xf32>
    %108 = arith.truncf %107 : vector<16x32xf32> to vector<16x32xbf16>
    %c4_76 = arith.constant 4 : index
    %c0_77 = arith.constant 0 : index
    %c0_78 = arith.constant 0 : index
    %109 = vector.load %arg6[%c4_76, %c0_77, %c0_78] : memref<5x32x32xbf16, #tpu.memory_space<vmem>>, vector<1x32x32xbf16>
    %110 = vector.shape_cast %109 : vector<1x32x32xbf16> to vector<32x32xbf16>
    %cst_79 = arith.constant dense<0.000000e+00> : vector<16x32xf32>
    %111 = tpu.matmul %108, %110, %cst_79 {dimension_numbers = #tpu.dot_dimension_numbers<[1], [0], [0], [1], [0, 0, 1, 1], [], []>} : vector<16x32xbf16>, vector<32x32xbf16>, vector<16x32xf32> -> vector<16x32xf32>
    %112 = arith.addf %106, %111 : vector<16x32xf32>
    %c0_80 = arith.constant 0 : index
    %c0_81 = arith.constant 0 : index
    %113 = vector.load %arg7[%c0_80, %c0_81] : memref<1x32xf32, #tpu.memory_space<vmem>>, vector<1x32xf32>
    %114 = vector.broadcast %113 : vector<1x32xf32> to vector<16x32xf32>
    %115 = arith.addf %112, %114 : vector<16x32xf32>
    %cst_82 = arith.constant 0.000000e+00 : f32
    %116 = vector.broadcast %cst_82 : f32 to vector<16x32xf32>
    %117 = arith.maximumf %115, %116 : vector<16x32xf32>
    %118 = arith.truncf %117 : vector<16x32xf32> to vector<16x32xbf16>
    %c0_83 = arith.constant 0 : index
    %c0_84 = arith.constant 0 : index
    %119 = vector.load %arg8[%c0_83, %c0_84] : memref<32x96xbf16, #tpu.memory_space<vmem>>, vector<32x96xbf16>
    %cst_85 = arith.constant dense<0.000000e+00> : vector<16x96xf32>
    %120 = tpu.matmul %118, %119, %cst_85 {dimension_numbers = #tpu.dot_dimension_numbers<[1], [0], [0], [1], [0, 0, 1, 1], [], []>} : vector<16x32xbf16>, vector<32x96xbf16>, vector<16x96xf32> -> vector<16x96xf32>
    %c0_86 = arith.constant 0 : index
    %c0_87 = arith.constant 0 : index
    %121 = vector.load %arg10[%c0_86, %c0_87] : memref<1x96xf32, #tpu.memory_space<vmem>>, vector<1x96xf32>
    %122 = vector.broadcast %121 : vector<1x96xf32> to vector<16x96xf32>
    %123 = arith.addf %120, %122 : vector<16x96xf32>
    %c0_88 = arith.constant 0 : index
    %c0_89 = arith.constant 0 : index
    %124 = vector.load %arg9[%c0_88, %c0_89] : memref<32x96xbf16, #tpu.memory_space<vmem>>, vector<32x96xbf16>
    %cst_90 = arith.constant dense<0.000000e+00> : vector<16x96xf32>
    %125 = tpu.matmul %118, %124, %cst_90 {dimension_numbers = #tpu.dot_dimension_numbers<[1], [0], [0], [1], [0, 0, 1, 1], [], []>} : vector<16x32xbf16>, vector<32x96xbf16>, vector<16x96xf32> -> vector<16x96xf32>
    %c0_91 = arith.constant 0 : index
    %c0_92 = arith.constant 0 : index
    %126 = vector.load %arg11[%c0_91, %c0_92] : memref<32x96xf32, #tpu.memory_space<vmem>>, vector<32x96xf32>
    %c0_93 = arith.constant 0 : index
    %c0_94 = arith.constant 0 : index
    %127 = vector.load %arg12[%c0_93, %c0_94] : memref<1x96xf32, #tpu.memory_space<vmem>>, vector<1x96xf32>
    %cst_95 = arith.constant 0.000000e+00 : f32
    %128 = vector.broadcast %cst_95 : f32 to vector<2x32xf32>
    %129 = vector.extract_strided_slice %123 {offsets = [0, 0], sizes = [2, 96], strides = [1, 1]} : vector<16x96xf32> to vector<2x96xf32>
    %130 = vector.extract_strided_slice %125 {offsets = [14, 0], sizes = [2, 96], strides = [1, 1]} : vector<16x96xf32> to vector<2x96xf32>
    %131 = arith.addf %129, %130 : vector<2x96xf32>
    %cst_96 = arith.constant dense<0.000000e+00> : vector<2x96xf32>
    %132 = tpu.matmul %128, %126, %cst_96 {dimension_numbers = #tpu.dot_dimension_numbers<[1], [0], [0], [1], [0, 0, 1, 1], [], []>} : vector<2x32xf32>, vector<32x96xf32>, vector<2x96xf32> -> vector<2x96xf32>
    %133 = vector.broadcast %127 : vector<1x96xf32> to vector<2x96xf32>
    %134 = arith.addf %132, %133 : vector<2x96xf32>
    %135 = vector.extract_strided_slice %131 {offsets = [0, 0], sizes = [2, 32], strides = [1, 1]} : vector<2x96xf32> to vector<2x32xf32>
    %136 = vector.extract_strided_slice %134 {offsets = [0, 0], sizes = [2, 32], strides = [1, 1]} : vector<2x96xf32> to vector<2x32xf32>
    %137 = arith.addf %135, %136 : vector<2x32xf32>
    %138 = arith.negf %137 : vector<2x32xf32>
    %139 = math.exp %138 : vector<2x32xf32>
    %cst_97 = arith.constant 1.000000e+00 : f32
    %140 = vector.broadcast %cst_97 : f32 to vector<2x32xf32>
    %141 = arith.addf %140, %139 : vector<2x32xf32>
    %142 = arith.divf %140, %141 : vector<2x32xf32>
    %143 = vector.extract_strided_slice %131 {offsets = [0, 32], sizes = [2, 32], strides = [1, 1]} : vector<2x96xf32> to vector<2x32xf32>
    %144 = vector.extract_strided_slice %134 {offsets = [0, 32], sizes = [2, 32], strides = [1, 1]} : vector<2x96xf32> to vector<2x32xf32>
    %145 = arith.addf %143, %144 : vector<2x32xf32>
    %146 = arith.negf %145 : vector<2x32xf32>
    %147 = math.exp %146 : vector<2x32xf32>
    %cst_98 = arith.constant 1.000000e+00 : f32
    %148 = vector.broadcast %cst_98 : f32 to vector<2x32xf32>
    %149 = arith.addf %148, %147 : vector<2x32xf32>
    %150 = arith.divf %148, %149 : vector<2x32xf32>
    %151 = vector.extract_strided_slice %131 {offsets = [0, 64], sizes = [2, 32], strides = [1, 1]} : vector<2x96xf32> to vector<2x32xf32>
    %152 = vector.extract_strided_slice %134 {offsets = [0, 64], sizes = [2, 32], strides = [1, 1]} : vector<2x96xf32> to vector<2x32xf32>
    %153 = arith.mulf %142, %152 : vector<2x32xf32>
    %154 = arith.addf %151, %153 : vector<2x32xf32>
    %155 = math.tanh %154 : vector<2x32xf32>
    %cst_99 = arith.constant 1.000000e+00 : f32
    %156 = vector.broadcast %cst_99 : f32 to vector<2x32xf32>
    %157 = arith.subf %156, %150 : vector<2x32xf32>
    %158 = arith.mulf %157, %155 : vector<2x32xf32>
    %159 = arith.mulf %150, %128 : vector<2x32xf32>
    %160 = arith.addf %158, %159 : vector<2x32xf32>
    %161 = vector.extract_strided_slice %160 {offsets = [0, 0], sizes = [2, 16], strides = [1, 1]} : vector<2x32xf32> to vector<2x16xf32>
    %162 = vector.shape_cast %161 : vector<2x16xf32> to vector<2x1x16xf32>
    %c0_100 = arith.constant 0 : index
    %c0_101 = arith.constant 0 : index
    %c0_102 = arith.constant 0 : index
    %163 = vector.load %arg15[%c0_100, %c0_101, %c0_102] : memref<2x8x32xf32, #tpu.memory_space<vmem>>, vector<2x1x16xf32>
    tpu.vector_store %arg15[%c0_100, %c0_101, %c0_102], %162 {strides = array<i32>} : memref<2x8x32xf32, #tpu.memory_space<vmem>>, vector<2x1x16xf32>,
    %164 = vector.extract_strided_slice %160 {offsets = [0, 16], sizes = [2, 16], strides = [1, 1]} : vector<2x32xf32> to vector<2x16xf32>
    %165 = vector.shape_cast %164 : vector<2x16xf32> to vector<2x1x16xf32>
    %c0_103 = arith.constant 0 : index
    %c7 = arith.constant 7 : index
    %c16 = arith.constant 16 : index
    %166 = vector.load %arg15[%c0_103, %c7, %c16] : memref<2x8x32xf32, #tpu.memory_space<vmem>>, vector<2x1x16xf32>
    tpu.vector_store %arg15[%c0_103, %c7, %c16], %165 {strides = array<i32>} : memref<2x8x32xf32, #tpu.memory_space<vmem>>, vector<2x1x16xf32>,
    %167 = vector.extract_strided_slice %123 {offsets = [2, 0], sizes = [2, 96], strides = [1, 1]} : vector<16x96xf32> to vector<2x96xf32>
    %168 = vector.extract_strided_slice %125 {offsets = [12, 0], sizes = [2, 96], strides = [1, 1]} : vector<16x96xf32> to vector<2x96xf32>
    %169 = arith.addf %167, %168 : vector<2x96xf32>
    %cst_104 = arith.constant dense<0.000000e+00> : vector<2x96xf32>
    %170 = tpu.matmul %160, %126, %cst_104 {dimension_numbers = #tpu.dot_dimension_numbers<[1], [0], [0], [1], [0, 0, 1, 1], [], []>} : vector<2x32xf32>, vector<32x96xf32>, vector<2x96xf32> -> vector<2x96xf32>
    %171 = vector.broadcast %127 : vector<1x96xf32> to vector<2x96xf32>
    %172 = arith.addf %170, %171 : vector<2x96xf32>
    %173 = vector.extract_strided_slice %169 {offsets = [0, 0], sizes = [2, 32], strides = [1, 1]} : vector<2x96xf32> to vector<2x32xf32>
    %174 = vector.extract_strided_slice %172 {offsets = [0, 0], sizes = [2, 32], strides = [1, 1]} : vector<2x96xf32> to vector<2x32xf32>
    %175 = arith.addf %173, %174 : vector<2x32xf32>
    %176 = arith.negf %175 : vector<2x32xf32>
    %177 = math.exp %176 : vector<2x32xf32>
    %cst_105 = arith.constant 1.000000e+00 : f32
    %178 = vector.broadcast %cst_105 : f32 to vector<2x32xf32>
    %179 = arith.addf %178, %177 : vector<2x32xf32>
    %180 = arith.divf %178, %179 : vector<2x32xf32>
    %181 = vector.extract_strided_slice %169 {offsets = [0, 32], sizes = [2, 32], strides = [1, 1]} : vector<2x96xf32> to vector<2x32xf32>
    %182 = vector.extract_strided_slice %172 {offsets = [0, 32], sizes = [2, 32], strides = [1, 1]} : vector<2x96xf32> to vector<2x32xf32>
    %183 = arith.addf %181, %182 : vector<2x32xf32>
    %184 = arith.negf %183 : vector<2x32xf32>
    %185 = math.exp %184 : vector<2x32xf32>
    %cst_106 = arith.constant 1.000000e+00 : f32
    %186 = vector.broadcast %cst_106 : f32 to vector<2x32xf32>
    %187 = arith.addf %186, %185 : vector<2x32xf32>
    %188 = arith.divf %186, %187 : vector<2x32xf32>
    %189 = vector.extract_strided_slice %169 {offsets = [0, 64], sizes = [2, 32], strides = [1, 1]} : vector<2x96xf32> to vector<2x32xf32>
    %190 = vector.extract_strided_slice %172 {offsets = [0, 64], sizes = [2, 32], strides = [1, 1]} : vector<2x96xf32> to vector<2x32xf32>
    %191 = arith.mulf %180, %190 : vector<2x32xf32>
    %192 = arith.addf %189, %191 : vector<2x32xf32>
    %193 = math.tanh %192 : vector<2x32xf32>
    %cst_107 = arith.constant 1.000000e+00 : f32
    %194 = vector.broadcast %cst_107 : f32 to vector<2x32xf32>
    %195 = arith.subf %194, %188 : vector<2x32xf32>
    %196 = arith.mulf %195, %193 : vector<2x32xf32>
    %197 = arith.mulf %188, %160 : vector<2x32xf32>
    %198 = arith.addf %196, %197 : vector<2x32xf32>
    %199 = vector.extract_strided_slice %198 {offsets = [0, 0], sizes = [2, 16], strides = [1, 1]} : vector<2x32xf32> to vector<2x16xf32>
    %200 = vector.shape_cast %199 : vector<2x16xf32> to vector<2x1x16xf32>
    %c0_108 = arith.constant 0 : index
    %c1_109 = arith.constant 1 : index
    %c0_110 = arith.constant 0 : index
    %201 = vector.load %arg15[%c0_108, %c1_109, %c0_110] : memref<2x8x32xf32, #tpu.memory_space<vmem>>, vector<2x1x16xf32>
    tpu.vector_store %arg15[%c0_108, %c1_109, %c0_110], %200 {strides = array<i32>} : memref<2x8x32xf32, #tpu.memory_space<vmem>>, vector<2x1x16xf32>,
    %202 = vector.extract_strided_slice %198 {offsets = [0, 16], sizes = [2, 16], strides = [1, 1]} : vector<2x32xf32> to vector<2x16xf32>
    %203 = vector.shape_cast %202 : vector<2x16xf32> to vector<2x1x16xf32>
    %c0_111 = arith.constant 0 : index
    %c6 = arith.constant 6 : index
    %c16_112 = arith.constant 16 : index
    %204 = vector.load %arg15[%c0_111, %c6, %c16_112] : memref<2x8x32xf32, #tpu.memory_space<vmem>>, vector<2x1x16xf32>
    tpu.vector_store %arg15[%c0_111, %c6, %c16_112], %203 {strides = array<i32>} : memref<2x8x32xf32, #tpu.memory_space<vmem>>, vector<2x1x16xf32>,
    %205 = vector.extract_strided_slice %123 {offsets = [4, 0], sizes = [2, 96], strides = [1, 1]} : vector<16x96xf32> to vector<2x96xf32>
    %206 = vector.extract_strided_slice %125 {offsets = [10, 0], sizes = [2, 96], strides = [1, 1]} : vector<16x96xf32> to vector<2x96xf32>
    %207 = arith.addf %205, %206 : vector<2x96xf32>
    %cst_113 = arith.constant dense<0.000000e+00> : vector<2x96xf32>
    %208 = tpu.matmul %198, %126, %cst_113 {dimension_numbers = #tpu.dot_dimension_numbers<[1], [0], [0], [1], [0, 0, 1, 1], [], []>} : vector<2x32xf32>, vector<32x96xf32>, vector<2x96xf32> -> vector<2x96xf32>
    %209 = vector.broadcast %127 : vector<1x96xf32> to vector<2x96xf32>
    %210 = arith.addf %208, %209 : vector<2x96xf32>
    %211 = vector.extract_strided_slice %207 {offsets = [0, 0], sizes = [2, 32], strides = [1, 1]} : vector<2x96xf32> to vector<2x32xf32>
    %212 = vector.extract_strided_slice %210 {offsets = [0, 0], sizes = [2, 32], strides = [1, 1]} : vector<2x96xf32> to vector<2x32xf32>
    %213 = arith.addf %211, %212 : vector<2x32xf32>
    %214 = arith.negf %213 : vector<2x32xf32>
    %215 = math.exp %214 : vector<2x32xf32>
    %cst_114 = arith.constant 1.000000e+00 : f32
    %216 = vector.broadcast %cst_114 : f32 to vector<2x32xf32>
    %217 = arith.addf %216, %215 : vector<2x32xf32>
    %218 = arith.divf %216, %217 : vector<2x32xf32>
    %219 = vector.extract_strided_slice %207 {offsets = [0, 32], sizes = [2, 32], strides = [1, 1]} : vector<2x96xf32> to vector<2x32xf32>
    %220 = vector.extract_strided_slice %210 {offsets = [0, 32], sizes = [2, 32], strides = [1, 1]} : vector<2x96xf32> to vector<2x32xf32>
    %221 = arith.addf %219, %220 : vector<2x32xf32>
    %222 = arith.negf %221 : vector<2x32xf32>
    %223 = math.exp %222 : vector<2x32xf32>
    %cst_115 = arith.constant 1.000000e+00 : f32
    %224 = vector.broadcast %cst_115 : f32 to vector<2x32xf32>
    %225 = arith.addf %224, %223 : vector<2x32xf32>
    %226 = arith.divf %224, %225 : vector<2x32xf32>
    %227 = vector.extract_strided_slice %207 {offsets = [0, 64], sizes = [2, 32], strides = [1, 1]} : vector<2x96xf32> to vector<2x32xf32>
    %228 = vector.extract_strided_slice %210 {offsets = [0, 64], sizes = [2, 32], strides = [1, 1]} : vector<2x96xf32> to vector<2x32xf32>
    %229 = arith.mulf %218, %228 : vector<2x32xf32>
    %230 = arith.addf %227, %229 : vector<2x32xf32>
    %231 = math.tanh %230 : vector<2x32xf32>
    %cst_116 = arith.constant 1.000000e+00 : f32
    %232 = vector.broadcast %cst_116 : f32 to vector<2x32xf32>
    %233 = arith.subf %232, %226 : vector<2x32xf32>
    %234 = arith.mulf %233, %231 : vector<2x32xf32>
    %235 = arith.mulf %226, %198 : vector<2x32xf32>
    %236 = arith.addf %234, %235 : vector<2x32xf32>
    %237 = vector.extract_strided_slice %236 {offsets = [0, 0], sizes = [2, 16], strides = [1, 1]} : vector<2x32xf32> to vector<2x16xf32>
    %238 = vector.shape_cast %237 : vector<2x16xf32> to vector<2x1x16xf32>
    %c0_117 = arith.constant 0 : index
    %c2_118 = arith.constant 2 : index
    %c0_119 = arith.constant 0 : index
    %239 = vector.load %arg15[%c0_117, %c2_118, %c0_119] : memref<2x8x32xf32, #tpu.memory_space<vmem>>, vector<2x1x16xf32>
    tpu.vector_store %arg15[%c0_117, %c2_118, %c0_119], %238 {strides = array<i32>} : memref<2x8x32xf32, #tpu.memory_space<vmem>>, vector<2x1x16xf32>,
    %240 = vector.extract_strided_slice %236 {offsets = [0, 16], sizes = [2, 16], strides = [1, 1]} : vector<2x32xf32> to vector<2x16xf32>
    %241 = vector.shape_cast %240 : vector<2x16xf32> to vector<2x1x16xf32>
    %c0_120 = arith.constant 0 : index
    %c5 = arith.constant 5 : index
    %c16_121 = arith.constant 16 : index
    %242 = vector.load %arg15[%c0_120, %c5, %c16_121] : memref<2x8x32xf32, #tpu.memory_space<vmem>>, vector<2x1x16xf32>
    tpu.vector_store %arg15[%c0_120, %c5, %c16_121], %241 {strides = array<i32>} : memref<2x8x32xf32, #tpu.memory_space<vmem>>, vector<2x1x16xf32>,
    %243 = vector.extract_strided_slice %123 {offsets = [6, 0], sizes = [2, 96], strides = [1, 1]} : vector<16x96xf32> to vector<2x96xf32>
    %244 = vector.extract_strided_slice %125 {offsets = [8, 0], sizes = [2, 96], strides = [1, 1]} : vector<16x96xf32> to vector<2x96xf32>
    %245 = arith.addf %243, %244 : vector<2x96xf32>
    %cst_122 = arith.constant dense<0.000000e+00> : vector<2x96xf32>
    %246 = tpu.matmul %236, %126, %cst_122 {dimension_numbers = #tpu.dot_dimension_numbers<[1], [0], [0], [1], [0, 0, 1, 1], [], []>} : vector<2x32xf32>, vector<32x96xf32>, vector<2x96xf32> -> vector<2x96xf32>
    %247 = vector.broadcast %127 : vector<1x96xf32> to vector<2x96xf32>
    %248 = arith.addf %246, %247 : vector<2x96xf32>
    %249 = vector.extract_strided_slice %245 {offsets = [0, 0], sizes = [2, 32], strides = [1, 1]} : vector<2x96xf32> to vector<2x32xf32>
    %250 = vector.extract_strided_slice %248 {offsets = [0, 0], sizes = [2, 32], strides = [1, 1]} : vector<2x96xf32> to vector<2x32xf32>
    %251 = arith.addf %249, %250 : vector<2x32xf32>
    %252 = arith.negf %251 : vector<2x32xf32>
    %253 = math.exp %252 : vector<2x32xf32>
    %cst_123 = arith.constant 1.000000e+00 : f32
    %254 = vector.broadcast %cst_123 : f32 to vector<2x32xf32>
    %255 = arith.addf %254, %253 : vector<2x32xf32>
    %256 = arith.divf %254, %255 : vector<2x32xf32>
    %257 = vector.extract_strided_slice %245 {offsets = [0, 32], sizes = [2, 32], strides = [1, 1]} : vector<2x96xf32> to vector<2x32xf32>
    %258 = vector.extract_strided_slice %248 {offsets = [0, 32], sizes = [2, 32], strides = [1, 1]} : vector<2x96xf32> to vector<2x32xf32>
    %259 = arith.addf %257, %258 : vector<2x32xf32>
    %260 = arith.negf %259 : vector<2x32xf32>
    %261 = math.exp %260 : vector<2x32xf32>
    %cst_124 = arith.constant 1.000000e+00 : f32
    %262 = vector.broadcast %cst_124 : f32 to vector<2x32xf32>
    %263 = arith.addf %262, %261 : vector<2x32xf32>
    %264 = arith.divf %262, %263 : vector<2x32xf32>
    %265 = vector.extract_strided_slice %245 {offsets = [0, 64], sizes = [2, 32], strides = [1, 1]} : vector<2x96xf32> to vector<2x32xf32>
    %266 = vector.extract_strided_slice %248 {offsets = [0, 64], sizes = [2, 32], strides = [1, 1]} : vector<2x96xf32> to vector<2x32xf32>
    %267 = arith.mulf %256, %266 : vector<2x32xf32>
    %268 = arith.addf %265, %267 : vector<2x32xf32>
    %269 = math.tanh %268 : vector<2x32xf32>
    %cst_125 = arith.constant 1.000000e+00 : f32
    %270 = vector.broadcast %cst_125 : f32 to vector<2x32xf32>
    %271 = arith.subf %270, %264 : vector<2x32xf32>
    %272 = arith.mulf %271, %269 : vector<2x32xf32>
    %273 = arith.mulf %264, %236 : vector<2x32xf32>
    %274 = arith.addf %272, %273 : vector<2x32xf32>
    %275 = vector.extract_strided_slice %274 {offsets = [0, 0], sizes = [2, 16], strides = [1, 1]} : vector<2x32xf32> to vector<2x16xf32>
    %276 = vector.shape_cast %275 : vector<2x16xf32> to vector<2x1x16xf32>
    %c0_126 = arith.constant 0 : index
    %c3_127 = arith.constant 3 : index
    %c0_128 = arith.constant 0 : index
    %277 = vector.load %arg15[%c0_126, %c3_127, %c0_128] : memref<2x8x32xf32, #tpu.memory_space<vmem>>, vector<2x1x16xf32>
    tpu.vector_store %arg15[%c0_126, %c3_127, %c0_128], %276 {strides = array<i32>} : memref<2x8x32xf32, #tpu.memory_space<vmem>>, vector<2x1x16xf32>,
    %278 = vector.extract_strided_slice %274 {offsets = [0, 16], sizes = [2, 16], strides = [1, 1]} : vector<2x32xf32> to vector<2x16xf32>
    %279 = vector.shape_cast %278 : vector<2x16xf32> to vector<2x1x16xf32>
    %c0_129 = arith.constant 0 : index
    %c4_130 = arith.constant 4 : index
    %c16_131 = arith.constant 16 : index
    %280 = vector.load %arg15[%c0_129, %c4_130, %c16_131] : memref<2x8x32xf32, #tpu.memory_space<vmem>>, vector<2x1x16xf32>
    tpu.vector_store %arg15[%c0_129, %c4_130, %c16_131], %279 {strides = array<i32>} : memref<2x8x32xf32, #tpu.memory_space<vmem>>, vector<2x1x16xf32>,
    %281 = vector.extract_strided_slice %123 {offsets = [8, 0], sizes = [2, 96], strides = [1, 1]} : vector<16x96xf32> to vector<2x96xf32>
    %282 = vector.extract_strided_slice %125 {offsets = [6, 0], sizes = [2, 96], strides = [1, 1]} : vector<16x96xf32> to vector<2x96xf32>
    %283 = arith.addf %281, %282 : vector<2x96xf32>
    %cst_132 = arith.constant dense<0.000000e+00> : vector<2x96xf32>
    %284 = tpu.matmul %274, %126, %cst_132 {dimension_numbers = #tpu.dot_dimension_numbers<[1], [0], [0], [1], [0, 0, 1, 1], [], []>} : vector<2x32xf32>, vector<32x96xf32>, vector<2x96xf32> -> vector<2x96xf32>
    %285 = vector.broadcast %127 : vector<1x96xf32> to vector<2x96xf32>
    %286 = arith.addf %284, %285 : vector<2x96xf32>
    %287 = vector.extract_strided_slice %283 {offsets = [0, 0], sizes = [2, 32], strides = [1, 1]} : vector<2x96xf32> to vector<2x32xf32>
    %288 = vector.extract_strided_slice %286 {offsets = [0, 0], sizes = [2, 32], strides = [1, 1]} : vector<2x96xf32> to vector<2x32xf32>
    %289 = arith.addf %287, %288 : vector<2x32xf32>
    %290 = arith.negf %289 : vector<2x32xf32>
    %291 = math.exp %290 : vector<2x32xf32>
    %cst_133 = arith.constant 1.000000e+00 : f32
    %292 = vector.broadcast %cst_133 : f32 to vector<2x32xf32>
    %293 = arith.addf %292, %291 : vector<2x32xf32>
    %294 = arith.divf %292, %293 : vector<2x32xf32>
    %295 = vector.extract_strided_slice %283 {offsets = [0, 32], sizes = [2, 32], strides = [1, 1]} : vector<2x96xf32> to vector<2x32xf32>
    %296 = vector.extract_strided_slice %286 {offsets = [0, 32], sizes = [2, 32], strides = [1, 1]} : vector<2x96xf32> to vector<2x32xf32>
    %297 = arith.addf %295, %296 : vector<2x32xf32>
    %298 = arith.negf %297 : vector<2x32xf32>
    %299 = math.exp %298 : vector<2x32xf32>
    %cst_134 = arith.constant 1.000000e+00 : f32
    %300 = vector.broadcast %cst_134 : f32 to vector<2x32xf32>
    %301 = arith.addf %300, %299 : vector<2x32xf32>
    %302 = arith.divf %300, %301 : vector<2x32xf32>
    %303 = vector.extract_strided_slice %283 {offsets = [0, 64], sizes = [2, 32], strides = [1, 1]} : vector<2x96xf32> to vector<2x32xf32>
    %304 = vector.extract_strided_slice %286 {offsets = [0, 64], sizes = [2, 32], strides = [1, 1]} : vector<2x96xf32> to vector<2x32xf32>
    %305 = arith.mulf %294, %304 : vector<2x32xf32>
    %306 = arith.addf %303, %305 : vector<2x32xf32>
    %307 = math.tanh %306 : vector<2x32xf32>
    %cst_135 = arith.constant 1.000000e+00 : f32
    %308 = vector.broadcast %cst_135 : f32 to vector<2x32xf32>
    %309 = arith.subf %308, %302 : vector<2x32xf32>
    %310 = arith.mulf %309, %307 : vector<2x32xf32>
    %311 = arith.mulf %302, %274 : vector<2x32xf32>
    %312 = arith.addf %310, %311 : vector<2x32xf32>
    %313 = vector.extract_strided_slice %312 {offsets = [0, 0], sizes = [2, 16], strides = [1, 1]} : vector<2x32xf32> to vector<2x16xf32>
    %314 = vector.shape_cast %313 : vector<2x16xf32> to vector<2x1x16xf32>
    %c0_136 = arith.constant 0 : index
    %c4_137 = arith.constant 4 : index
    %c0_138 = arith.constant 0 : index
    %315 = vector.load %arg15[%c0_136, %c4_137, %c0_138] : memref<2x8x32xf32, #tpu.memory_space<vmem>>, vector<2x1x16xf32>
    tpu.vector_store %arg15[%c0_136, %c4_137, %c0_138], %314 {strides = array<i32>} : memref<2x8x32xf32, #tpu.memory_space<vmem>>, vector<2x1x16xf32>,
    %316 = vector.extract_strided_slice %312 {offsets = [0, 16], sizes = [2, 16], strides = [1, 1]} : vector<2x32xf32> to vector<2x16xf32>
    %317 = vector.shape_cast %316 : vector<2x16xf32> to vector<2x1x16xf32>
    %c0_139 = arith.constant 0 : index
    %c3_140 = arith.constant 3 : index
    %c16_141 = arith.constant 16 : index
    %318 = vector.load %arg15[%c0_139, %c3_140, %c16_141] : memref<2x8x32xf32, #tpu.memory_space<vmem>>, vector<2x1x16xf32>
    tpu.vector_store %arg15[%c0_139, %c3_140, %c16_141], %317 {strides = array<i32>} : memref<2x8x32xf32, #tpu.memory_space<vmem>>, vector<2x1x16xf32>,
    %319 = vector.extract_strided_slice %123 {offsets = [10, 0], sizes = [2, 96], strides = [1, 1]} : vector<16x96xf32> to vector<2x96xf32>
    %320 = vector.extract_strided_slice %125 {offsets = [4, 0], sizes = [2, 96], strides = [1, 1]} : vector<16x96xf32> to vector<2x96xf32>
    %321 = arith.addf %319, %320 : vector<2x96xf32>
    %cst_142 = arith.constant dense<0.000000e+00> : vector<2x96xf32>
    %322 = tpu.matmul %312, %126, %cst_142 {dimension_numbers = #tpu.dot_dimension_numbers<[1], [0], [0], [1], [0, 0, 1, 1], [], []>} : vector<2x32xf32>, vector<32x96xf32>, vector<2x96xf32> -> vector<2x96xf32>
    %323 = vector.broadcast %127 : vector<1x96xf32> to vector<2x96xf32>
    %324 = arith.addf %322, %323 : vector<2x96xf32>
    %325 = vector.extract_strided_slice %321 {offsets = [0, 0], sizes = [2, 32], strides = [1, 1]} : vector<2x96xf32> to vector<2x32xf32>
    %326 = vector.extract_strided_slice %324 {offsets = [0, 0], sizes = [2, 32], strides = [1, 1]} : vector<2x96xf32> to vector<2x32xf32>
    %327 = arith.addf %325, %326 : vector<2x32xf32>
    %328 = arith.negf %327 : vector<2x32xf32>
    %329 = math.exp %328 : vector<2x32xf32>
    %cst_143 = arith.constant 1.000000e+00 : f32
    %330 = vector.broadcast %cst_143 : f32 to vector<2x32xf32>
    %331 = arith.addf %330, %329 : vector<2x32xf32>
    %332 = arith.divf %330, %331 : vector<2x32xf32>
    %333 = vector.extract_strided_slice %321 {offsets = [0, 32], sizes = [2, 32], strides = [1, 1]} : vector<2x96xf32> to vector<2x32xf32>
    %334 = vector.extract_strided_slice %324 {offsets = [0, 32], sizes = [2, 32], strides = [1, 1]} : vector<2x96xf32> to vector<2x32xf32>
    %335 = arith.addf %333, %334 : vector<2x32xf32>
    %336 = arith.negf %335 : vector<2x32xf32>
    %337 = math.exp %336 : vector<2x32xf32>
    %cst_144 = arith.constant 1.000000e+00 : f32
    %338 = vector.broadcast %cst_144 : f32 to vector<2x32xf32>
    %339 = arith.addf %338, %337 : vector<2x32xf32>
    %340 = arith.divf %338, %339 : vector<2x32xf32>
    %341 = vector.extract_strided_slice %321 {offsets = [0, 64], sizes = [2, 32], strides = [1, 1]} : vector<2x96xf32> to vector<2x32xf32>
    %342 = vector.extract_strided_slice %324 {offsets = [0, 64], sizes = [2, 32], strides = [1, 1]} : vector<2x96xf32> to vector<2x32xf32>
    %343 = arith.mulf %332, %342 : vector<2x32xf32>
    %344 = arith.addf %341, %343 : vector<2x32xf32>
    %345 = math.tanh %344 : vector<2x32xf32>
    %cst_145 = arith.constant 1.000000e+00 : f32
    %346 = vector.broadcast %cst_145 : f32 to vector<2x32xf32>
    %347 = arith.subf %346, %340 : vector<2x32xf32>
    %348 = arith.mulf %347, %345 : vector<2x32xf32>
    %349 = arith.mulf %340, %312 : vector<2x32xf32>
    %350 = arith.addf %348, %349 : vector<2x32xf32>
    %351 = vector.extract_strided_slice %350 {offsets = [0, 0], sizes = [2, 16], strides = [1, 1]} : vector<2x32xf32> to vector<2x16xf32>
    %352 = vector.shape_cast %351 : vector<2x16xf32> to vector<2x1x16xf32>
    %c0_146 = arith.constant 0 : index
    %c5_147 = arith.constant 5 : index
    %c0_148 = arith.constant 0 : index
    %353 = vector.load %arg15[%c0_146, %c5_147, %c0_148] : memref<2x8x32xf32, #tpu.memory_space<vmem>>, vector<2x1x16xf32>
    tpu.vector_store %arg15[%c0_146, %c5_147, %c0_148], %352 {strides = array<i32>} : memref<2x8x32xf32, #tpu.memory_space<vmem>>, vector<2x1x16xf32>,
    %354 = vector.extract_strided_slice %350 {offsets = [0, 16], sizes = [2, 16], strides = [1, 1]} : vector<2x32xf32> to vector<2x16xf32>
    %355 = vector.shape_cast %354 : vector<2x16xf32> to vector<2x1x16xf32>
    %c0_149 = arith.constant 0 : index
    %c2_150 = arith.constant 2 : index
    %c16_151 = arith.constant 16 : index
    %356 = vector.load %arg15[%c0_149, %c2_150, %c16_151] : memref<2x8x32xf32, #tpu.memory_space<vmem>>, vector<2x1x16xf32>
    tpu.vector_store %arg15[%c0_149, %c2_150, %c16_151], %355 {strides = array<i32>} : memref<2x8x32xf32, #tpu.memory_space<vmem>>, vector<2x1x16xf32>,
    %357 = vector.extract_strided_slice %123 {offsets = [12, 0], sizes = [2, 96], strides = [1, 1]} : vector<16x96xf32> to vector<2x96xf32>
    %358 = vector.extract_strided_slice %125 {offsets = [2, 0], sizes = [2, 96], strides = [1, 1]} : vector<16x96xf32> to vector<2x96xf32>
    %359 = arith.addf %357, %358 : vector<2x96xf32>
    %cst_152 = arith.constant dense<0.000000e+00> : vector<2x96xf32>
    %360 = tpu.matmul %350, %126, %cst_152 {dimension_numbers = #tpu.dot_dimension_numbers<[1], [0], [0], [1], [0, 0, 1, 1], [], []>} : vector<2x32xf32>, vector<32x96xf32>, vector<2x96xf32> -> vector<2x96xf32>
    %361 = vector.broadcast %127 : vector<1x96xf32> to vector<2x96xf32>
    %362 = arith.addf %360, %361 : vector<2x96xf32>
    %363 = vector.extract_strided_slice %359 {offsets = [0, 0], sizes = [2, 32], strides = [1, 1]} : vector<2x96xf32> to vector<2x32xf32>
    %364 = vector.extract_strided_slice %362 {offsets = [0, 0], sizes = [2, 32], strides = [1, 1]} : vector<2x96xf32> to vector<2x32xf32>
    %365 = arith.addf %363, %364 : vector<2x32xf32>
    %366 = arith.negf %365 : vector<2x32xf32>
    %367 = math.exp %366 : vector<2x32xf32>
    %cst_153 = arith.constant 1.000000e+00 : f32
    %368 = vector.broadcast %cst_153 : f32 to vector<2x32xf32>
    %369 = arith.addf %368, %367 : vector<2x32xf32>
    %370 = arith.divf %368, %369 : vector<2x32xf32>
    %371 = vector.extract_strided_slice %359 {offsets = [0, 32], sizes = [2, 32], strides = [1, 1]} : vector<2x96xf32> to vector<2x32xf32>
    %372 = vector.extract_strided_slice %362 {offsets = [0, 32], sizes = [2, 32], strides = [1, 1]} : vector<2x96xf32> to vector<2x32xf32>
    %373 = arith.addf %371, %372 : vector<2x32xf32>
    %374 = arith.negf %373 : vector<2x32xf32>
    %375 = math.exp %374 : vector<2x32xf32>
    %cst_154 = arith.constant 1.000000e+00 : f32
    %376 = vector.broadcast %cst_154 : f32 to vector<2x32xf32>
    %377 = arith.addf %376, %375 : vector<2x32xf32>
    %378 = arith.divf %376, %377 : vector<2x32xf32>
    %379 = vector.extract_strided_slice %359 {offsets = [0, 64], sizes = [2, 32], strides = [1, 1]} : vector<2x96xf32> to vector<2x32xf32>
    %380 = vector.extract_strided_slice %362 {offsets = [0, 64], sizes = [2, 32], strides = [1, 1]} : vector<2x96xf32> to vector<2x32xf32>
    %381 = arith.mulf %370, %380 : vector<2x32xf32>
    %382 = arith.addf %379, %381 : vector<2x32xf32>
    %383 = math.tanh %382 : vector<2x32xf32>
    %cst_155 = arith.constant 1.000000e+00 : f32
    %384 = vector.broadcast %cst_155 : f32 to vector<2x32xf32>
    %385 = arith.subf %384, %378 : vector<2x32xf32>
    %386 = arith.mulf %385, %383 : vector<2x32xf32>
    %387 = arith.mulf %378, %350 : vector<2x32xf32>
    %388 = arith.addf %386, %387 : vector<2x32xf32>
    %389 = vector.extract_strided_slice %388 {offsets = [0, 0], sizes = [2, 16], strides = [1, 1]} : vector<2x32xf32> to vector<2x16xf32>
    %390 = vector.shape_cast %389 : vector<2x16xf32> to vector<2x1x16xf32>
    %c0_156 = arith.constant 0 : index
    %c6_157 = arith.constant 6 : index
    %c0_158 = arith.constant 0 : index
    %391 = vector.load %arg15[%c0_156, %c6_157, %c0_158] : memref<2x8x32xf32, #tpu.memory_space<vmem>>, vector<2x1x16xf32>
    tpu.vector_store %arg15[%c0_156, %c6_157, %c0_158], %390 {strides = array<i32>} : memref<2x8x32xf32, #tpu.memory_space<vmem>>, vector<2x1x16xf32>,
    %392 = vector.extract_strided_slice %388 {offsets = [0, 16], sizes = [2, 16], strides = [1, 1]} : vector<2x32xf32> to vector<2x16xf32>
    %393 = vector.shape_cast %392 : vector<2x16xf32> to vector<2x1x16xf32>
    %c0_159 = arith.constant 0 : index
    %c1_160 = arith.constant 1 : index
    %c16_161 = arith.constant 16 : index
    %394 = vector.load %arg15[%c0_159, %c1_160, %c16_161] : memref<2x8x32xf32, #tpu.memory_space<vmem>>, vector<2x1x16xf32>
    tpu.vector_store %arg15[%c0_159, %c1_160, %c16_161], %393 {strides = array<i32>} : memref<2x8x32xf32, #tpu.memory_space<vmem>>, vector<2x1x16xf32>,
    %395 = vector.extract_strided_slice %123 {offsets = [14, 0], sizes = [2, 96], strides = [1, 1]} : vector<16x96xf32> to vector<2x96xf32>
    %396 = vector.extract_strided_slice %125 {offsets = [0, 0], sizes = [2, 96], strides = [1, 1]} : vector<16x96xf32> to vector<2x96xf32>
    %397 = arith.addf %395, %396 : vector<2x96xf32>
    %cst_162 = arith.constant dense<0.000000e+00> : vector<2x96xf32>
    %398 = tpu.matmul %388, %126, %cst_162 {dimension_numbers = #tpu.dot_dimension_numbers<[1], [0], [0], [1], [0, 0, 1, 1], [], []>} : vector<2x32xf32>, vector<32x96xf32>, vector<2x96xf32> -> vector<2x96xf32>
    %399 = vector.broadcast %127 : vector<1x96xf32> to vector<2x96xf32>
    %400 = arith.addf %398, %399 : vector<2x96xf32>
    %401 = vector.extract_strided_slice %397 {offsets = [0, 0], sizes = [2, 32], strides = [1, 1]} : vector<2x96xf32> to vector<2x32xf32>
    %402 = vector.extract_strided_slice %400 {offsets = [0, 0], sizes = [2, 32], strides = [1, 1]} : vector<2x96xf32> to vector<2x32xf32>
    %403 = arith.addf %401, %402 : vector<2x32xf32>
    %404 = arith.negf %403 : vector<2x32xf32>
    %405 = math.exp %404 : vector<2x32xf32>
    %cst_163 = arith.constant 1.000000e+00 : f32
    %406 = vector.broadcast %cst_163 : f32 to vector<2x32xf32>
    %407 = arith.addf %406, %405 : vector<2x32xf32>
    %408 = arith.divf %406, %407 : vector<2x32xf32>
    %409 = vector.extract_strided_slice %397 {offsets = [0, 32], sizes = [2, 32], strides = [1, 1]} : vector<2x96xf32> to vector<2x32xf32>
    %410 = vector.extract_strided_slice %400 {offsets = [0, 32], sizes = [2, 32], strides = [1, 1]} : vector<2x96xf32> to vector<2x32xf32>
    %411 = arith.addf %409, %410 : vector<2x32xf32>
    %412 = arith.negf %411 : vector<2x32xf32>
    %413 = math.exp %412 : vector<2x32xf32>
    %cst_164 = arith.constant 1.000000e+00 : f32
    %414 = vector.broadcast %cst_164 : f32 to vector<2x32xf32>
    %415 = arith.addf %414, %413 : vector<2x32xf32>
    %416 = arith.divf %414, %415 : vector<2x32xf32>
    %417 = vector.extract_strided_slice %397 {offsets = [0, 64], sizes = [2, 32], strides = [1, 1]} : vector<2x96xf32> to vector<2x32xf32>
    %418 = vector.extract_strided_slice %400 {offsets = [0, 64], sizes = [2, 32], strides = [1, 1]} : vector<2x96xf32> to vector<2x32xf32>
    %419 = arith.mulf %408, %418 : vector<2x32xf32>
    %420 = arith.addf %417, %419 : vector<2x32xf32>
    %421 = math.tanh %420 : vector<2x32xf32>
    %cst_165 = arith.constant 1.000000e+00 : f32
    %422 = vector.broadcast %cst_165 : f32 to vector<2x32xf32>
    %423 = arith.subf %422, %416 : vector<2x32xf32>
    %424 = arith.mulf %423, %421 : vector<2x32xf32>
    %425 = arith.mulf %416, %388 : vector<2x32xf32>
    %426 = arith.addf %424, %425 : vector<2x32xf32>
    %427 = vector.extract_strided_slice %426 {offsets = [0, 0], sizes = [2, 16], strides = [1, 1]} : vector<2x32xf32> to vector<2x16xf32>
    %428 = vector.shape_cast %427 : vector<2x16xf32> to vector<2x1x16xf32>
    %c0_166 = arith.constant 0 : index
    %c7_167 = arith.constant 7 : index
    %c0_168 = arith.constant 0 : index
    %429 = vector.load %arg15[%c0_166, %c7_167, %c0_168] : memref<2x8x32xf32, #tpu.memory_space<vmem>>, vector<2x1x16xf32>
    tpu.vector_store %arg15[%c0_166, %c7_167, %c0_168], %428 {strides = array<i32>} : memref<2x8x32xf32, #tpu.memory_space<vmem>>, vector<2x1x16xf32>,
    %430 = vector.extract_strided_slice %426 {offsets = [0, 16], sizes = [2, 16], strides = [1, 1]} : vector<2x32xf32> to vector<2x16xf32>
    %431 = vector.shape_cast %430 : vector<2x16xf32> to vector<2x1x16xf32>
    %c0_169 = arith.constant 0 : index
    %c0_170 = arith.constant 0 : index
    %c16_171 = arith.constant 16 : index
    %432 = vector.load %arg15[%c0_169, %c0_170, %c16_171] : memref<2x8x32xf32, #tpu.memory_space<vmem>>, vector<2x1x16xf32>
    tpu.vector_store %arg15[%c0_169, %c0_170, %c16_171], %431 {strides = array<i32>} : memref<2x8x32xf32, #tpu.memory_space<vmem>>, vector<2x1x16xf32>,
    %c0_172 = arith.constant 0 : index
    %c0_173 = arith.constant 0 : index
    %433 = vector.load %arg13[%c0_172, %c0_173] : memref<32x32xf32, #tpu.memory_space<vmem>>, vector<32x32xf32>
    %cst_174 = arith.constant dense<0.000000e+00> : vector<2x32xf32>
    %434 = tpu.matmul %426, %433, %cst_174 {dimension_numbers = #tpu.dot_dimension_numbers<[1], [0], [0], [1], [0, 0, 1, 1], [], []>} : vector<2x32xf32>, vector<32x32xf32>, vector<2x32xf32> -> vector<2x32xf32>
    %c0_175 = arith.constant 0 : index
    %c0_176 = arith.constant 0 : index
    %435 = vector.load %arg14[%c0_175, %c0_176] : memref<1x32xf32, #tpu.memory_space<vmem>>, vector<1x32xf32>
    %436 = vector.broadcast %435 : vector<1x32xf32> to vector<2x32xf32>
    %437 = arith.addf %434, %436 : vector<2x32xf32>
    %438 = math.tanh %437 : vector<2x32xf32>
    %c0_177 = arith.constant 0 : index
    %c0_178 = arith.constant 0 : index
    %439 = vector.load %arg16[%c0_177, %c0_178] : memref<2x32xf32, #tpu.memory_space<vmem>>, vector<2x32xf32>
    tpu.vector_store %arg16[%c0_177, %c0_178], %438 {strides = array<i32>} : memref<2x32xf32, #tpu.memory_space<vmem>>, vector<2x32xf32>,
    return
  }
}

</mosaic_0001>

<llo_original>
// kernel: encoder_forward.1
$region0: #{encoder_forward.1}
  #allocation0 [shape = 'u32[]', space=smem, size = 0x4, offset = 0x4, fixed_abs, tag = 'smem constant byte address 0x4 - core index']
  #allocation1 [shape = 'u32[72,128]{1,0:T(1,128)}', space=vmem, size = 0x9000, scoped, tag = 'internal scratch']
  #allocation2 [shape = 'f32[24,32]{1,0:T(8,128)}', space=vmem, size = 0x3000, scoped, tag = 'scratch operand']
  %s0 = inlined_call_operand.vmem [shape: s32[16,1], index: 0, kind: input, shape index: {}]
  %s1 = inlined_call_operand.vmem [shape: f32[40,32], index: 1, kind: input, shape index: {}]
  %s2 = inlined_call_operand.vmem [shape: bf16[5,32,32], index: 2, kind: input, shape index: {}]
  %s3 = inlined_call_operand.vmem [shape: f32[1,32], index: 3, kind: input, shape index: {}]
  %s4 = inlined_call_operand.hbm [shape: bf16[5,32,32], index: 4, kind: input, shape index: {}]
  %s5 = inlined_call_operand.vmem [shape: f32[1,32], index: 5, kind: input, shape index: {}]
  %s6 = inlined_call_operand.hbm [shape: bf16[5,32,32], index: 6, kind: input, shape index: {}]
  %s7 = inlined_call_operand.vmem [shape: f32[1,32], index: 7, kind: input, shape index: {}]
  %s8 = inlined_call_operand.hbm [shape: bf16[32,96], index: 8, kind: input, shape index: {}]
  %s9 = inlined_call_operand.hbm [shape: bf16[32,96], index: 9, kind: input, shape index: {}]
  %s10 = inlined_call_operand.vmem [shape: f32[1,96], index: 10, kind: input, shape index: {}]
  %s11 = inlined_call_operand.hbm [shape: f32[32,96], index: 11, kind: input, shape index: {}]
  %s12 = inlined_call_operand.hbm [shape: f32[1,96], index: 12, kind: input, shape index: {}]
  %s13 = inlined_call_operand.hbm [shape: f32[32,32], index: 13, kind: input, shape index: {}]
  %s14 = inlined_call_operand.hbm [shape: f32[1,32], index: 14, kind: input, shape index: {}]
  %s15 = inlined_call_operand.hbm [shape: f32[2,8,32], index: 15, kind: output, shape index: {0}]
  %s16 = inlined_call_operand.hbm [shape: f32[2,32], index: 16, kind: output, shape index: {1}]
  %17 = xla_tuple %s15, %s16
  %s18 = sld [smem:[#allocation0]]
  $region110: #{encoder_forward.1} parent=0
    _
  %s20 = ssub.s32 1, %s18
  %s21 = scalar_select 0, %s20, %s18
  $region1: #{encoder_forward.1} parent=0
    #allocation3 [shape = 'u8[40960]{0}', space=vmem, size = 0xa000, scoped, tag = 'input window, operand 4, single buffered']
    #allocation4 [shape = 's32[1]{0}', space=sflag, size = 0x4, scoped, tag = 'scoped memory for encoder_forward.1']
    #allocation5 [shape = 's32[1]{0}', space=sflag, size = 0x4, scoped, tag = 'scoped memory for encoder_forward.1']
    #allocation6 [shape = 'u8[40960]{0}', space=vmem, size = 0xa000, scoped, tag = 'input window, operand 6, single buffered']
    #allocation7 [shape = 's32[1]{0}', space=sflag, size = 0x4, scoped, tag = 'scoped memory for encoder_forward.1']
    #allocation8 [shape = 'u8[8192]{0}', space=vmem, size = 0x2000, scoped, tag = 'input window, operand 8, single buffered']
    #allocation9 [shape = 'u8[8192]{0}', space=vmem, size = 0x2000, scoped, tag = 'input window, operand 9, single buffered']
    #allocation10 [shape = 's32[1]{0}', space=sflag, size = 0x4, scoped, tag = 'scoped memory for encoder_forward.1']
    #allocation11 [shape = 'u8[16384]{0}', space=vmem, size = 0x4000, scoped, tag = 'input window, operand 11, single buffered']
    #allocation12 [shape = 'u8[512]{0}', space=vmem, size = 0x400, scoped, tag = 'input window, operand 12, single buffered']
    #allocation13 [shape = 's32[1]{0}', space=sflag, size = 0x4, scoped, tag = 'scoped memory for encoder_forward.1']
    #allocation14 [shape = 'u8[16384]{0}', space=vmem, size = 0x4000, scoped, tag = 'input window, operand 13, single buffered']
    #allocation15 [shape = 'u8[512]{0}', space=vmem, size = 0x400, scoped, tag = 'input window, operand 14, single buffered']
    #allocation16 [shape = 's32[1]{0}', space=sflag, size = 0x4, scoped, tag = 'scoped memory for encoder_forward.1']
    #allocation17 [shape = 'u8[8192]{0}', space=vmem, size = 0x2000, scoped, tag = 'output window, operand 0, single buffered']
    #allocation18 [shape = 'u8[1024]{0}', space=vmem, size = 0x400, scoped, tag = 'output window, operand 1, single buffered']
    #allocation19 [shape = 's32[1]{0}', space=sflag, size = 0x4, scoped, tag = 'scoped memory for encoder_forward.1']
    %22 = vsyncpa [#allocation4], 0
    %23 = vsyncpa [#allocation7], 0
    %24 = vsyncpa [#allocation10], 0
    %25 = vsyncpa [#allocation13], 0
    %26 = vsyncpa [#allocation16], 0
    %27 = vsyncpa [#allocation5], 0
    %28 = vsyncpa [#allocation19], 0
    // Predicated region
    $region2: #{encoder_forward.1} parent=1 // pred_check
      _
    $region3: #{encoder_forward.1} parent=1 // pred_check_branch
      %30 = sbr.rel (0) target = $region5
    $region4: #{encoder_forward.1} parent=1 // pred_region
      _
    $region5: #{encoder_forward.1} parent=1 // pred_fallthru
      _
    // Predicated region
    $region6: #{encoder_forward.1} parent=1 // pred_check
      _
    $region7: #{encoder_forward.1} parent=1 // pred_check_branch
      %32 = sbr.rel (0) target = $region9
    $region8: #{encoder_forward.1} parent=1 // pred_region
      _
    $region9: #{encoder_forward.1} parent=1 // pred_fallthru
      _
    // Predicated region
    $region10: #{encoder_forward.1} parent=1 // pred_check
      _
    $region11: #{encoder_forward.1} parent=1 // pred_check_branch
      %34 = sbr.rel (0) target = $region13
    $region12: #{encoder_forward.1} parent=1 // pred_region
      _
    $region13: #{encoder_forward.1} parent=1 // pred_fallthru
      _
    // Predicated region
    $region14: #{encoder_forward.1} parent=1 // pred_check
      _
    $region15: #{encoder_forward.1} parent=1 // pred_check_branch
      %36 = sbr.rel (0) target = $region17
    $region16: #{encoder_forward.1} parent=1 // pred_region
      _
    $region17: #{encoder_forward.1} parent=1 // pred_fallthru
      _
    // Predicated region
    $region18: #{encoder_forward.1} parent=1 // pred_check
      _
    $region19: #{encoder_forward.1} parent=1 // pred_check_branch
      %38 = sbr.rel (0) target = $region21
    $region20: #{encoder_forward.1} parent=1 // pred_region
      %40 = vsyncadd [#allocation4], 0
      %s41 = sshll.u32 %s4, 4
      %s42 = int_to_ptr.hbm [resolvable:$true] %s41
      %s43 = sshll.u32 [#allocation3], 4
      %s44 = int_to_ptr.vmem [resolvable:$true] %s43
      %49 = dma.hbm_to_vmem [thread:$0]  %s42, 1280, %s44, [#allocation4], 64, 64, 4
    $region21: #{encoder_forward.1} parent=1 // pred_fallthru
      _
    // Predicated region
    $region22: #{encoder_forward.1} parent=1 // pred_check
      _
    $region23: #{encoder_forward.1} parent=1 // pred_check_branch
      %51 = sbr.rel (0) target = $region25
    $region24: #{encoder_forward.1} parent=1 // pred_region
      _
    $region25: #{encoder_forward.1} parent=1 // pred_fallthru
      _
    // Predicated region
    $region26: #{encoder_forward.1} parent=1 // pred_check
      _
    $region27: #{encoder_forward.1} parent=1 // pred_check_branch
      %53 = sbr.rel (0) target = $region29
    $region28: #{encoder_forward.1} parent=1 // pred_region
      %55 = vsyncadd [#allocation7], 0
      %s56 = sshll.u32 %s6, 4
      %s57 = int_to_ptr.hbm [resolvable:$true] %s56
      %s58 = sshll.u32 [#allocation6], 4
      %s59 = int_to_ptr.vmem [resolvable:$true] %s58
      %64 = dma.hbm_to_vmem [thread:$0]  %s57, 1280, %s59, [#allocation7], 64, 64, 4
    $region29: #{encoder_forward.1} parent=1 // pred_fallthru
      _
    // Predicated region
    $region30: #{encoder_forward.1} parent=1 // pred_check
      _
    $region31: #{encoder_forward.1} parent=1 // pred_check_branch
      %66 = sbr.rel (0) target = $region33
    $region32: #{encoder_forward.1} parent=1 // pred_region
      _
    $region33: #{encoder_forward.1} parent=1 // pred_fallthru
      _
    // Predicated region
    $region34: #{encoder_forward.1} parent=1 // pred_check
      _
    $region35: #{encoder_forward.1} parent=1 // pred_check_branch
      %68 = sbr.rel (0) target = $region37
    $region36: #{encoder_forward.1} parent=1 // pred_region
      %70 = vsyncadd [#allocation7], 0
      %s71 = sshll.u32 %s8, 4
      %s72 = int_to_ptr.hbm [resolvable:$true] %s71
      %s73 = sshll.u32 [#allocation8], 4
      %s74 = int_to_ptr.vmem [resolvable:$true] %s73
      %79 = dma.hbm_to_vmem [thread:$0]  %s72, 256, %s74, [#allocation7], 64, 64, 4
    $region37: #{encoder_forward.1} parent=1 // pred_fallthru
      _
    // Predicated region
    $region38: #{encoder_forward.1} parent=1 // pred_check
      _
    $region39: #{encoder_forward.1} parent=1 // pred_check_branch
      %81 = sbr.rel (0) target = $region41
    $region40: #{encoder_forward.1} parent=1 // pred_region
      %83 = vsyncadd [#allocation10], 0
      %s84 = sshll.u32 %s9, 4
      %s85 = int_to_ptr.hbm [resolvable:$true] %s84
      %s86 = sshll.u32 [#allocation9], 4
      %s87 = int_to_ptr.vmem [resolvable:$true] %s86
      %92 = dma.hbm_to_vmem [thread:$0]  %s85, 256, %s87, [#allocation10], 64, 64, 4
    $region41: #{encoder_forward.1} parent=1 // pred_fallthru
      _
    // Predicated region
    $region42: #{encoder_forward.1} parent=1 // pred_check
      _
    $region43: #{encoder_forward.1} parent=1 // pred_check_branch
      %94 = sbr.rel (0) target = $region45
    $region44: #{encoder_forward.1} parent=1 // pred_region
      _
    $region45: #{encoder_forward.1} parent=1 // pred_fallthru
      _
    // Predicated region
    $region46: #{encoder_forward.1} parent=1 // pred_check
      _
    $region47: #{encoder_forward.1} parent=1 // pred_check_branch
      %96 = sbr.rel (0) target = $region49
    $region48: #{encoder_forward.1} parent=1 // pred_region
      %98 = vsyncadd [#allocation10], 0
      %s99 = sshll.u32 %s11, 4
      %s100 = int_to_ptr.hbm [resolvable:$true] %s99
      %s101 = sshll.u32 [#allocation11], 4
      %s102 = int_to_ptr.vmem [resolvable:$true] %s101
      %107 = dma.hbm_to_vmem [thread:$0]  %s100, 512, %s102, [#allocation10], 128, 128, 8
    $region49: #{encoder_forward.1} parent=1 // pred_fallthru
      _
    // Predicated region
    $region50: #{encoder_forward.1} parent=1 // pred_check
      _
    $region51: #{encoder_forward.1} parent=1 // pred_check_branch
      %109 = sbr.rel (0) target = $region53
    $region52: #{encoder_forward.1} parent=1 // pred_region
      %111 = vsyncadd [#allocation13], 0
      %s113 = sshll.u32 %s12, 4
      %s114 = int_to_ptr.hbm [resolvable:$true] %s113
      %s115 = sshll.u32 [#allocation12], 4
      %s116 = int_to_ptr.vmem [resolvable:$true] %s115
      %118 = dma.hbm_to_vmem [thread:$0]  %s114, 16, %s116, [#allocation13]
    $region53: #{encoder_forward.1} parent=1 // pred_fallthru
      _
    // Predicated region
    $region54: #{encoder_forward.1} parent=1 // pred_check
      _
    $region55: #{encoder_forward.1} parent=1 // pred_check_branch
      %120 = sbr.rel (0) target = $region57
    $region56: #{encoder_forward.1} parent=1 // pred_region
      %122 = vsyncadd [#allocation13], 0
      %s123 = sshll.u32 %s13, 4
      %s124 = int_to_ptr.hbm [resolvable:$true] %s123
      %s125 = sshll.u32 [#allocation14], 4
      %s126 = int_to_ptr.vmem [resolvable:$true] %s125
      %131 = dma.hbm_to_vmem [thread:$0]  %s124, 512, %s126, [#allocation13], 128, 128, 8
    $region57: #{encoder_forward.1} parent=1 // pred_fallthru
      _
    // Predicated region
    $region58: #{encoder_forward.1} parent=1 // pred_check
      _
    $region59: #{encoder_forward.1} parent=1 // pred_check_branch
      %133 = sbr.rel (0) target = $region61
    $region60: #{encoder_forward.1} parent=1 // pred_region
      %135 = vsyncadd [#allocation16], 0
      %s137 = sshll.u32 %s14, 4
      %s138 = int_to_ptr.hbm [resolvable:$true] %s137
      %s139 = sshll.u32 [#allocation15], 4
      %s140 = int_to_ptr.vmem [resolvable:$true] %s139
      %142 = dma.hbm_to_vmem [thread:$0]  %s138, 16, %s140, [#allocation16]
    $region61: #{encoder_forward.1} parent=1 // pred_fallthru
      _
    // Predicated region
    $region62: #{encoder_forward.1} parent=1 // pred_check
      _
    $region63: #{encoder_forward.1} parent=1 // pred_check_branch
      %144 = sbr.rel (0) target = $region65
    $region64: #{encoder_forward.1} parent=1 // pred_region
      %146 = dma.done [#allocation4], 1280
    $region65: #{encoder_forward.1} parent=1 // pred_fallthru
      _
    // Predicated region
    $region66: #{encoder_forward.1} parent=1 // pred_check
      _
    $region67: #{encoder_forward.1} parent=1 // pred_check_branch
      %148 = sbr.rel (0) target = $region69
    $region68: #{encoder_forward.1} parent=1 // pred_region
      %150 = dma.done [#allocation7], 1280
    $region69: #{encoder_forward.1} parent=1 // pred_fallthru
      _
    // Predicated region
    $region70: #{encoder_forward.1} parent=1 // pred_check
      _
    $region71: #{encoder_forward.1} parent=1 // pred_check_branch
      %152 = sbr.rel (0) target = $region73
    $region72: #{encoder_forward.1} parent=1 // pred_region
      %154 = dma.done [#allocation7], 256
    $region73: #{encoder_forward.1} parent=1 // pred_fallthru
      _
    // Predicated region
    $region74: #{encoder_forward.1} parent=1 // pred_check
      _
    $region75: #{encoder_forward.1} parent=1 // pred_check_branch
      %156 = sbr.rel (0) target = $region77
    $region76: #{encoder_forward.1} parent=1 // pred_region
      %158 = dma.done [#allocation10], 256
    $region77: #{encoder_forward.1} parent=1 // pred_fallthru
      _
    // Predicated region
    $region78: #{encoder_forward.1} parent=1 // pred_check
      _
    $region79: #{encoder_forward.1} parent=1 // pred_check_branch
      %160 = sbr.rel (0) target = $region81
    $region80: #{encoder_forward.1} parent=1 // pred_region
      %162 = dma.done [#allocation10], 512
    $region81: #{encoder_forward.1} parent=1 // pred_fallthru
      _
    // Predicated region
    $region82: #{encoder_forward.1} parent=1 // pred_check
      _
    $region83: #{encoder_forward.1} parent=1 // pred_check_branch
      %164 = sbr.rel (0) target = $region85
    $region84: #{encoder_forward.1} parent=1 // pred_region
      %166 = dma.done [#allocation13], 16
    $region85: #{encoder_forward.1} parent=1 // pred_fallthru
      _
    // Predicated region
    $region86: #{encoder_forward.1} parent=1 // pred_check
      _
    $region87: #{encoder_forward.1} parent=1 // pred_check_branch
      %168 = sbr.rel (0) target = $region89
    $region88: #{encoder_forward.1} parent=1 // pred_region
      %170 = dma.done [#allocation13], 512
    $region89: #{encoder_forward.1} parent=1 // pred_fallthru
      _
    // Predicated region
    $region90: #{encoder_forward.1} parent=1 // pred_check
      _
    $region91: #{encoder_forward.1} parent=1 // pred_check_branch
      %172 = sbr.rel (0) target = $region93
    $region92: #{encoder_forward.1} parent=1 // pred_region
      %174 = dma.done [#allocation16], 16
    $region93: #{encoder_forward.1} parent=1 // pred_fallthru
      _
    %v176 = vld [vmem:[%s0] sm:$0xff]
    %v177 = vld [vmem:[%s0 + $0x8] sm:$0xff]
    %v178 = vlaneseq
    %v179 = vand.u32 %v178, 127
    %180 = vset.pattern.permute.xlu0 0
    %181 = vperm.xlu0 %180, %v176
    %v182 = vpop.permute.xlu0 %181
    %183 = vset.pattern.permute.xlu0 0
    %184 = vperm.xlu0 %183, %v177
    %v185 = vpop.permute.xlu0 %184
    %vm186 = vcmp.eq.s32.totalorder %v179, %v182
    %vm187 = vcmp.eq.s32.totalorder %v179, %v185
    %v188 = vsel %vm186, 1, 0
    %v189 = vsel %vm187, 1, 0
    %v190 = vcvt.s32.f32 %v188
    %v191 = vcvt.s32.f32 %v189
    %v192 = vld [vmem:[%s1] sm:$0xff]
    %v193 = vld [vmem:[%s1 + $0x8] sm:$0xff]
    %v194 = vld [vmem:[%s1 + $0x10] sm:$0xff]
    %v195 = vld [vmem:[%s1 + $0x18] sm:$0xff]
    %v196 = vld [vmem:[%s1 + $0x20] sm:$0xff]
    %vm197 = vcmask 326656
    %v199 = vsel %vm197, %v190, 0
    %v202 = vsel %vm197, %v191, 0
    %204 = vmatpush.msra.mxu0 0.0
    %205 = vmatpush.msra.mxu0 0.0
    %206 = vmatpush.msra.mxu0 0.0
    %207 = vmatpush.msra.mxu0 0.0
    %208 = vmatpush.msra.mxu0 0.0
    %209 = vmatpush.msra.mxu0 0.0
    %210 = vmatpush.msra.mxu0 0.0
    %211 = vmatpush.msra.mxu0 0.0
    %212 = vmatpush.msra.mxu0 0.0
    %213 = vmatpush.msra.mxu0 0.0
    %214 = vmatpush.msra.mxu0 0.0
    %215 = vmatpush.msra.mxu0 %v196
    %216 = vmatpush.msra.mxu0 %v195
    %217 = vmatpush.msra.mxu0 %v194
    %218 = vmatpush.msra.mxu0 %v193
    %219 = vmatpush.msra.mxu0 %v192
    %220 = vmatmul.f32.gmra.mxu0 %v199
    %v221 = vpop.f32.mrf.mxu0
    %v222 = vadd.f32 0.0, %v221
    %223 = vmatmul.f32.gmra.mxu0 %v202
    %v224 = vpop.f32.mrf.mxu0
    %v225 = vadd.f32 0.0, %v224
    %226 = vdwg.mxu0
    %vm227 = vcmask 261120
    %228 = vst.msk [vmem:[#allocation2] sm:$0xff] %vm227, 0.0
    %229 = vst.msk [vmem:[#allocation2 + $0x8] sm:$0xff] %vm227, 0.0
    %230 = vst.msk [vmem:[#allocation2 + $0x10] sm:$0xff] %vm227, 0.0
    %231 = vst.msk [vmem:[#allocation2 + $0x4] sm:$0xff] %vm227, %v222
    %232 = vst.msk [vmem:[#allocation2 + $0xc] sm:$0xff] %vm227, %v225
    %v233 = vld [vmem:[#allocation2] sm:$0xff]
    %v234 = vld [vmem:[#allocation2 + $0x8] sm:$0xff]
    %v235 = vld [vmem:[#allocation2 + $0x10] sm:$0xff]
    %v236 = vpack.c.bf16 %v234, %v233
    %v237 = vld [vmem:[%s2] sm:$0xf]
    %v238 = vld [vmem:[%s2 + $0x4] sm:$0xf]
    %v239 = vld [vmem:[%s2 + $0x8] sm:$0xf]
    %v240 = vld [vmem:[%s2 + $0xc] sm:$0xf]
    %v241 = vpack.c.bf16 %v235, %v235
    %s242 = scalar_lea.vmem %s2, 16
    %v243 = vld [vmem:[%s242] sm:$0xf]
    %v244 = vld [vmem:[%s242 + $0x4] sm:$0xf]
    %v245 = vld [vmem:[%s242 + $0x8] sm:$0xf]
    %v246 = vld [vmem:[%s242 + $0xc] sm:$0xf]
    %vm249 = vcmask 1046528
    %v250 = vrot.slane %v236, 1
    %v251 = vrot.slane %v241, 1
    %v252 = vsel %vm249, %v250, %v251
    %v257 = vunpack.c.l.b16 %v243
    %v258 = vunpack.c.l.b16 %v244
    %v259 = vunpack.c.l.b16 %v245
    %v260 = vunpack.c.l.b16 %v246
    %v261 = vpack.c.b16 %v258, %v257
    %v262 = vpack.c.b16 %v260, %v259
    %v266 = vsel %vm227, %v252, 0
    %268 = vmatpush.bf16.msra.mxu0 0
    %269 = vmatpush.bf16.msra.mxu0 0
    %270 = vmatpush.bf16.msra.mxu0 0
    %271 = vmatpush.bf16.msra.mxu0 0
    %272 = vmatpush.bf16.msra.mxu0 0
    %273 = vmatpush.bf16.msra.mxu0 0
    %274 = vmatpush.bf16.msra.mxu0 %v262
    %275 = vmatpush.bf16.msra.mxu0 %v261
    %276 = vmatmul.bf16.gmra.mxu0 %v266
    %v277 = vpop.f32.mrf.mxu0
    %v278 = vadd.f32 0.0, %v277
    %v279 = vpop.f32.mrf.mxu0
    %v280 = vadd.f32 0.0, %v279
    %281 = vdwg.mxu0
    %v286 = vunpack.c.l.b16 %v237
    %v287 = vunpack.c.l.b16 %v238
    %v288 = vunpack.c.l.b16 %v239
    %v289 = vunpack.c.l.b16 %v240
    %v290 = vpack.c.b16 %v287, %v286
    %v291 = vpack.c.b16 %v289, %v288
    %v295 = vsel %vm227, %v236, 0
    %297 = vmatpush.bf16.msra.mxu0 0
    %298 = vmatpush.bf16.msra.mxu0 0
    %299 = vmatpush.bf16.msra.mxu0 0
    %300 = vmatpush.bf16.msra.mxu0 0
    %301 = vmatpush.bf16.msra.mxu0 0
    %302 = vmatpush.bf16.msra.mxu0 0
    %303 = vmatpush.bf16.msra.mxu0 %v291
    %304 = vmatpush.bf16.msra.mxu0 %v290
    %305 = vmatmul.bf16.gmra.mxu0 %v295
    %v306 = vpop.f32.mrf.mxu0
    %v307 = vadd.f32 %v278, %v306
    %v308 = vpop.f32.mrf.mxu0
    %v309 = vadd.f32 %v280, %v308
    %310 = vdwg.mxu0
    %s311 = scalar_lea.vmem %s2, 32
    %v312 = vld [vmem:[%s311] sm:$0xf]
    %v313 = vld [vmem:[%s311 + $0x4] sm:$0xf]
    %v314 = vld [vmem:[%s311 + $0x8] sm:$0xf]
    %v315 = vld [vmem:[%s311 + $0xc] sm:$0xf]
    %vm316 = vcmask 1045504
    %v317 = vrot.slane %v236, 2
    %v318 = vrot.slane %v241, 2
    %v319 = vsel %vm316, %v317, %v318
    %v324 = vunpack.c.l.b16 %v312
    %v325 = vunpack.c.l.b16 %v313
    %v326 = vunpack.c.l.b16 %v314
    %v327 = vunpack.c.l.b16 %v315
    %v328 = vpack.c.b16 %v325, %v324
    %v329 = vpack.c.b16 %v327, %v326
    %v333 = vsel %vm227, %v319, 0
    %335 = vmatpush.bf16.msra.mxu0 0
    %336 = vmatpush.bf16.msra.mxu0 0
    %337 = vmatpush.bf16.msra.mxu0 0
    %338 = vmatpush.bf16.msra.mxu0 0
    %339 = vmatpush.bf16.msra.mxu0 0
    %340 = vmatpush.bf16.msra.mxu0 0
    %341 = vmatpush.bf16.msra.mxu0 %v329
    %342 = vmatpush.bf16.msra.mxu0 %v328
    %343 = vmatmul.bf16.gmra.mxu0 %v333
    %v344 = vpop.f32.mrf.mxu0
    %v345 = vadd.f32 0.0, %v344
    %v346 = vpop.f32.mrf.mxu0
    %v347 = vadd.f32 0.0, %v346
    %348 = vdwg.mxu0
    %v349 = vadd.f32 %v307, %v345
    %v350 = vadd.f32 %v309, %v347
    %s351 = scalar_lea.vmem %s2, 48
    %v352 = vld [vmem:[%s351] sm:$0xf]
    %v353 = vld [vmem:[%s351 + $0x4] sm:$0xf]
    %v354 = vld [vmem:[%s351 + $0x8] sm:$0xf]
    %v355 = vld [vmem:[%s351 + $0xc] sm:$0xf]
    %vm356 = vcmask 1044480
    %v357 = vrot.slane %v236, 3
    %v358 = vrot.slane %v241, 3
    %v359 = vsel %vm356, %v357, %v358
    %v364 = vunpack.c.l.b16 %v352
    %v365 = vunpack.c.l.b16 %v353
    %v366 = vunpack.c.l.b16 %v354
    %v367 = vunpack.c.l.b16 %v355
    %v368 = vpack.c.b16 %v365, %v364
    %v369 = vpack.c.b16 %v367, %v366
    %v373 = vsel %vm227, %v359, 0
    %375 = vmatpush.bf16.msra.mxu0 0
    %376 = vmatpush.bf16.msra.mxu0 0
    %377 = vmatpush.bf16.msra.mxu0 0
    %378 = vmatpush.bf16.msra.mxu0 0
    %379 = vmatpush.bf16.msra.mxu0 0
    %380 = vmatpush.bf16.msra.mxu0 0
    %381 = vmatpush.bf16.msra.mxu0 %v369
    %382 = vmatpush.bf16.msra.mxu0 %v368
    %383 = vmatmul.bf16.gmra.mxu0 %v373
    %v384 = vpop.f32.mrf.mxu0
    %v385 = vadd.f32 0.0, %v384
    %v386 = vpop.f32.mrf.mxu0
    %v387 = vadd.f32 0.0, %v386
    %388 = vdwg.mxu0
    %v389 = vadd.f32 %v349, %v385
    %v390 = vadd.f32 %v350, %v387
    %v391 = vpack.c.bf16 %v235, %v234
    %s392 = scalar_lea.vmem %s2, 64
    %v393 = vld [vmem:[%s392] sm:$0xf]
    %v394 = vld [vmem:[%s392 + $0x4] sm:$0xf]
    %v395 = vld [vmem:[%s392 + $0x8] sm:$0xf]
    %v396 = vld [vmem:[%s392 + $0xc] sm:$0xf]
    %v401 = vunpack.c.l.b16 %v393
    %v402 = vunpack.c.l.b16 %v394
    %v403 = vunpack.c.l.b16 %v395
    %v404 = vunpack.c.l.b16 %v396
    %v405 = vpack.c.b16 %v402, %v401
    %v406 = vpack.c.b16 %v404, %v403
    %v410 = vsel %vm227, %v391, 0
    %412 = vmatpush.bf16.msra.mxu0 0
    %413 = vmatpush.bf16.msra.mxu0 0
    %414 = vmatpush.bf16.msra.mxu0 0
    %415 = vmatpush.bf16.msra.mxu0 0
    %416 = vmatpush.bf16.msra.mxu0 0
    %417 = vmatpush.bf16.msra.mxu0 0
    %418 = vmatpush.bf16.msra.mxu0 %v406
    %419 = vmatpush.bf16.msra.mxu0 %v405
    %420 = vmatmul.bf16.gmra.mxu0 %v410
    %v421 = vpop.f32.mrf.mxu0
    %v422 = vadd.f32 0.0, %v421
    %v423 = vpop.f32.mrf.mxu0
    %v424 = vadd.f32 0.0, %v423
    %425 = vdwg.mxu0
    %v426 = vadd.f32 %v389, %v422
    %v427 = vadd.f32 %v390, %v424
    %v428 = vld [vmem:[%s3] sm:$0x1]
    %v430 = vperm.slane %v428, 0
    %v432 = vadd.f32 %v426, %v430
    %v433 = vadd.f32 %v427, %v430
    %v434 = vmax.f32 %v432, 0.0
    %v435 = vmax.f32 %v433, 0.0
    %436 = vst.msk [vmem:[#allocation2 + $0x4] sm:$0xff] %vm227, %v434
    %437 = vst.msk [vmem:[#allocation2 + $0xc] sm:$0xff] %vm227, %v435
    %v438 = vld [vmem:[#allocation2] sm:$0xff]
    %v439 = vld [vmem:[#allocation2 + $0x8] sm:$0xff]
    %v440 = vld [vmem:[#allocation2 + $0x10] sm:$0xff]
    %v441 = vpack.c.bf16 %v439, %v438
    %v442 = vld [vmem:[#allocation3] sm:$0xf]
    %v443 = vld [vmem:[#allocation3 + $0x4] sm:$0xf]
    %v444 = vld [vmem:[#allocation3 + $0x8] sm:$0xf]
    %v445 = vld [vmem:[#allocation3 + $0xc] sm:$0xf]
    %v446 = vpack.c.bf16 %v440, %v440
    %s447 = scalar_lea.vmem [#allocation3], 16
    %v448 = vld [vmem:[%s447] sm:$0xf]
    %v449 = vld [vmem:[%s447 + $0x4] sm:$0xf]
    %v450 = vld [vmem:[%s447 + $0x8] sm:$0xf]
    %v451 = vld [vmem:[%s447 + $0xc] sm:$0xf]
    %v454 = vrot.slane %v441, 1
    %v455 = vrot.slane %v446, 1
    %v456 = vsel %vm249, %v454, %v455
    %v461 = vunpack.c.l.b16 %v448
    %v462 = vunpack.c.l.b16 %v449
    %v463 = vunpack.c.l.b16 %v450
    %v464 = vunpack.c.l.b16 %v451
    %v465 = vpack.c.b16 %v462, %v461
    %v466 = vpack.c.b16 %v464, %v463
    %v470 = vsel %vm227, %v456, 0
    %472 = vmatpush.bf16.msra.mxu0 0
    %473 = vmatpush.bf16.msra.mxu0 0
    %474 = vmatpush.bf16.msra.mxu0 0
    %475 = vmatpush.bf16.msra.mxu0 0
    %476 = vmatpush.bf16.msra.mxu0 0
    %477 = vmatpush.bf16.msra.mxu0 0
    %478 = vmatpush.bf16.msra.mxu0 %v466
    %479 = vmatpush.bf16.msra.mxu0 %v465
    %480 = vmatmul.bf16.gmra.mxu0 %v470
    %v481 = vpop.f32.mrf.mxu0
    %v482 = vadd.f32 0.0, %v481
    %v483 = vpop.f32.mrf.mxu0
    %v484 = vadd.f32 0.0, %v483
    %485 = vdwg.mxu0
    %v490 = vunpack.c.l.b16 %v442
    %v491 = vunpack.c.l.b16 %v443
    %v492 = vunpack.c.l.b16 %v444
    %v493 = vunpack.c.l.b16 %v445
    %v494 = vpack.c.b16 %v491, %v490
    %v495 = vpack.c.b16 %v493, %v492
    %v499 = vsel %vm227, %v441, 0
    %501 = vmatpush.bf16.msra.mxu0 0
    %502 = vmatpush.bf16.msra.mxu0 0
    %503 = vmatpush.bf16.msra.mxu0 0
    %504 = vmatpush.bf16.msra.mxu0 0
    %505 = vmatpush.bf16.msra.mxu0 0
    %506 = vmatpush.bf16.msra.mxu0 0
    %507 = vmatpush.bf16.msra.mxu0 %v495
    %508 = vmatpush.bf16.msra.mxu0 %v494
    %509 = vmatmul.bf16.gmra.mxu0 %v499
    %v510 = vpop.f32.mrf.mxu0
    %v511 = vadd.f32 %v482, %v510
    %v512 = vpop.f32.mrf.mxu0
    %v513 = vadd.f32 %v484, %v512
    %514 = vdwg.mxu0
    %s515 = scalar_lea.vmem [#allocation3], 32
    %v516 = vld [vmem:[%s515] sm:$0xf]
    %v517 = vld [vmem:[%s515 + $0x4] sm:$0xf]
    %v518 = vld [vmem:[%s515 + $0x8] sm:$0xf]
    %v519 = vld [vmem:[%s515 + $0xc] sm:$0xf]
    %v520 = vrot.slane %v441, 2
    %v521 = vrot.slane %v446, 2
    %v522 = vsel %vm316, %v520, %v521
    %v527 = vunpack.c.l.b16 %v516
    %v528 = vunpack.c.l.b16 %v517
    %v529 = vunpack.c.l.b16 %v518
    %v530 = vunpack.c.l.b16 %v519
    %v531 = vpack.c.b16 %v528, %v527
    %v532 = vpack.c.b16 %v530, %v529
    %v536 = vsel %vm227, %v522, 0
    %538 = vmatpush.bf16.msra.mxu0 0
    %539 = vmatpush.bf16.msra.mxu0 0
    %540 = vmatpush.bf16.msra.mxu0 0
    %541 = vmatpush.bf16.msra.mxu0 0
    %542 = vmatpush.bf16.msra.mxu0 0
    %543 = vmatpush.bf16.msra.mxu0 0
    %544 = vmatpush.bf16.msra.mxu0 %v532
    %545 = vmatpush.bf16.msra.mxu0 %v531
    %546 = vmatmul.bf16.gmra.mxu0 %v536
    %v547 = vpop.f32.mrf.mxu0
    %v548 = vadd.f32 0.0, %v547
    %v549 = vpop.f32.mrf.mxu0
    %v550 = vadd.f32 0.0, %v549
    %551 = vdwg.mxu0
    %v552 = vadd.f32 %v511, %v548
    %v553 = vadd.f32 %v513, %v550
    %s554 = scalar_lea.vmem [#allocation3], 48
    %v555 = vld [vmem:[%s554] sm:$0xf]
    %v556 = vld [vmem:[%s554 + $0x4] sm:$0xf]
    %v557 = vld [vmem:[%s554 + $0x8] sm:$0xf]
    %v558 = vld [vmem:[%s554 + $0xc] sm:$0xf]
    %v559 = vrot.slane %v441, 3
    %v560 = vrot.slane %v446, 3
    %v561 = vsel %vm356, %v559, %v560
    %v566 = vunpack.c.l.b16 %v555
    %v567 = vunpack.c.l.b16 %v556
    %v568 = vunpack.c.l.b16 %v557
    %v569 = vunpack.c.l.b16 %v558
    %v570 = vpack.c.b16 %v567, %v566
    %v571 = vpack.c.b16 %v569, %v568
    %v575 = vsel %vm227, %v561, 0
    %577 = vmatpush.bf16.msra.mxu0 0
    %578 = vmatpush.bf16.msra.mxu0 0
    %579 = vmatpush.bf16.msra.mxu0 0
    %580 = vmatpush.bf16.msra.mxu0 0
    %581 = vmatpush.bf16.msra.mxu0 0
    %582 = vmatpush.bf16.msra.mxu0 0
    %583 = vmatpush.bf16.msra.mxu0 %v571
    %584 = vmatpush.bf16.msra.mxu0 %v570
    %585 = vmatmul.bf16.gmra.mxu0 %v575
    %v586 = vpop.f32.mrf.mxu0
    %v587 = vadd.f32 0.0, %v586
    %v588 = vpop.f32.mrf.mxu0
    %v589 = vadd.f32 0.0, %v588
    %590 = vdwg.mxu0
    %v591 = vadd.f32 %v552, %v587
    %v592 = vadd.f32 %v553, %v589
    %v593 = vpack.c.bf16 %v440, %v439
    %s594 = scalar_lea.vmem [#allocation3], 64
    %v595 = vld [vmem:[%s594] sm:$0xf]
    %v596 = vld [vmem:[%s594 + $0x4] sm:$0xf]
    %v597 = vld [vmem:[%s594 + $0x8] sm:$0xf]
    %v598 = vld [vmem:[%s594 + $0xc] sm:$0xf]
    %v603 = vunpack.c.l.b16 %v595
    %v604 = vunpack.c.l.b16 %v596
    %v605 = vunpack.c.l.b16 %v597
    %v606 = vunpack.c.l.b16 %v598
    %v607 = vpack.c.b16 %v604, %v603
    %v608 = vpack.c.b16 %v606, %v605
    %v612 = vsel %vm227, %v593, 0
    %614 = vmatpush.bf16.msra.mxu0 0
    %615 = vmatpush.bf16.msra.mxu0 0
    %616 = vmatpush.bf16.msra.mxu0 0
    %617 = vmatpush.bf16.msra.mxu0 0
    %618 = vmatpush.bf16.msra.mxu0 0
    %619 = vmatpush.bf16.msra.mxu0 0
    %620 = vmatpush.bf16.msra.mxu0 %v608
    %621 = vmatpush.bf16.msra.mxu0 %v607
    %622 = vmatmul.bf16.gmra.mxu0 %v612
    %v623 = vpop.f32.mrf.mxu0
    %v624 = vadd.f32 0.0, %v623
    %v625 = vpop.f32.mrf.mxu0
    %v626 = vadd.f32 0.0, %v625
    %627 = vdwg.mxu0
    %v628 = vadd.f32 %v591, %v624
    %v629 = vadd.f32 %v592, %v626
    %v630 = vld [vmem:[%s5] sm:$0x1]
    %v632 = vperm.slane %v630, 0
    %v634 = vadd.f32 %v628, %v632
    %v635 = vadd.f32 %v629, %v632
    %v636 = vmax.f32 %v634, 0.0
    %v637 = vmax.f32 %v635, 0.0
    %638 = vst.msk [vmem:[#allocation2 + $0x4] sm:$0xff] %vm227, %v636
    %639 = vst.msk [vmem:[#allocation2 + $0xc] sm:$0xff] %vm227, %v637
    %v640 = vld [vmem:[#allocation2] sm:$0xff]
    %v641 = vld [vmem:[#allocation2 + $0x8] sm:$0xff]
    %v642 = vld [vmem:[#allocation2 + $0x10] sm:$0xff]
    %v643 = vpack.c.bf16 %v641, %v640
    %v644 = vld [vmem:[#allocation6] sm:$0xf]
    %v645 = vld [vmem:[#allocation6 + $0x4] sm:$0xf]
    %v646 = vld [vmem:[#allocation6 + $0x8] sm:$0xf]
    %v647 = vld [vmem:[#allocation6 + $0xc] sm:$0xf]
    %v648 = vpack.c.bf16 %v642, %v642
    %s649 = scalar_lea.vmem [#allocation6], 16
    %v650 = vld [vmem:[%s649] sm:$0xf]
    %v651 = vld [vmem:[%s649 + $0x4] sm:$0xf]
    %v652 = vld [vmem:[%s649 + $0x8] sm:$0xf]
    %v653 = vld [vmem:[%s649 + $0xc] sm:$0xf]
    %v656 = vrot.slane %v643, 1
    %v657 = vrot.slane %v648, 1
    %v658 = vsel %vm249, %v656, %v657
    %v663 = vunpack.c.l.b16 %v650
    %v664 = vunpack.c.l.b16 %v651
    %v665 = vunpack.c.l.b16 %v652
    %v666 = vunpack.c.l.b16 %v653
    %v667 = vpack.c.b16 %v664, %v663
    %v668 = vpack.c.b16 %v666, %v665
    %v672 = vsel %vm227, %v658, 0
    %674 = vmatpush.bf16.msra.mxu0 0
    %675 = vmatpush.bf16.msra.mxu0 0
    %676 = vmatpush.bf16.msra.mxu0 0
    %677 = vmatpush.bf16.msra.mxu0 0
    %678 = vmatpush.bf16.msra.mxu0 0
    %679 = vmatpush.bf16.msra.mxu0 0
    %680 = vmatpush.bf16.msra.mxu0 %v668
    %681 = vmatpush.bf16.msra.mxu0 %v667
    %682 = vmatmul.bf16.gmra.mxu0 %v672
    %v683 = vpop.f32.mrf.mxu0
    %v684 = vadd.f32 0.0, %v683
    %v685 = vpop.f32.mrf.mxu0
    %v686 = vadd.f32 0.0, %v685
    %687 = vdwg.mxu0
    %v692 = vunpack.c.l.b16 %v644
    %v693 = vunpack.c.l.b16 %v645
    %v694 = vunpack.c.l.b16 %v646
    %v695 = vunpack.c.l.b16 %v647
    %v696 = vpack.c.b16 %v693, %v692
    %v697 = vpack.c.b16 %v695, %v694
    %v701 = vsel %vm227, %v643, 0
    %703 = vmatpush.bf16.msra.mxu0 0
    %704 = vmatpush.bf16.msra.mxu0 0
    %705 = vmatpush.bf16.msra.mxu0 0
    %706 = vmatpush.bf16.msra.mxu0 0
    %707 = vmatpush.bf16.msra.mxu0 0
    %708 = vmatpush.bf16.msra.mxu0 0
    %709 = vmatpush.bf16.msra.mxu0 %v697
    %710 = vmatpush.bf16.msra.mxu0 %v696
    %711 = vmatmul.bf16.gmra.mxu0 %v701
    %v712 = vpop.f32.mrf.mxu0
    %v713 = vadd.f32 %v684, %v712
    %v714 = vpop.f32.mrf.mxu0
    %v715 = vadd.f32 %v686, %v714
    %716 = vdwg.mxu0
    %s717 = scalar_lea.vmem [#allocation6], 32
    %v718 = vld [vmem:[%s717] sm:$0xf]
    %v719 = vld [vmem:[%s717 + $0x4] sm:$0xf]
    %v720 = vld [vmem:[%s717 + $0x8] sm:$0xf]
    %v721 = vld [vmem:[%s717 + $0xc] sm:$0xf]
    %v722 = vrot.slane %v643, 2
    %v723 = vrot.slane %v648, 2
    %v724 = vsel %vm316, %v722, %v723
    %v729 = vunpack.c.l.b16 %v718
    %v730 = vunpack.c.l.b16 %v719
    %v731 = vunpack.c.l.b16 %v720
    %v732 = vunpack.c.l.b16 %v721
    %v733 = vpack.c.b16 %v730, %v729
    %v734 = vpack.c.b16 %v732, %v731
    %v738 = vsel %vm227, %v724, 0
    %740 = vmatpush.bf16.msra.mxu0 0
    %741 = vmatpush.bf16.msra.mxu0 0
    %742 = vmatpush.bf16.msra.mxu0 0
    %743 = vmatpush.bf16.msra.mxu0 0
    %744 = vmatpush.bf16.msra.mxu0 0
    %745 = vmatpush.bf16.msra.mxu0 0
    %746 = vmatpush.bf16.msra.mxu0 %v734
    %747 = vmatpush.bf16.msra.mxu0 %v733
    %748 = vmatmul.bf16.gmra.mxu0 %v738
    %v749 = vpop.f32.mrf.mxu0
    %v750 = vadd.f32 0.0, %v749
    %v751 = vpop.f32.mrf.mxu0
    %v752 = vadd.f32 0.0, %v751
    %753 = vdwg.mxu0
    %v754 = vadd.f32 %v713, %v750
    %v755 = vadd.f32 %v715, %v752
    %s756 = scalar_lea.vmem [#allocation6], 48
    %v757 = vld [vmem:[%s756] sm:$0xf]
    %v758 = vld [vmem:[%s756 + $0x4] sm:$0xf]
    %v759 = vld [vmem:[%s756 + $0x8] sm:$0xf]
    %v760 = vld [vmem:[%s756 + $0xc] sm:$0xf]
    %v761 = vrot.slane %v643, 3
    %v762 = vrot.slane %v648, 3
    %v763 = vsel %vm356, %v761, %v762
    %v768 = vunpack.c.l.b16 %v757
    %v769 = vunpack.c.l.b16 %v758
    %v770 = vunpack.c.l.b16 %v759
    %v771 = vunpack.c.l.b16 %v760
    %v772 = vpack.c.b16 %v769, %v768
    %v773 = vpack.c.b16 %v771, %v770
    %v777 = vsel %vm227, %v763, 0
    %779 = vmatpush.bf16.msra.mxu0 0
    %780 = vmatpush.bf16.msra.mxu0 0
    %781 = vmatpush.bf16.msra.mxu0 0
    %782 = vmatpush.bf16.msra.mxu0 0
    %783 = vmatpush.bf16.msra.mxu0 0
    %784 = vmatpush.bf16.msra.mxu0 0
    %785 = vmatpush.bf16.msra.mxu0 %v773
    %786 = vmatpush.bf16.msra.mxu0 %v772
    %787 = vmatmul.bf16.gmra.mxu0 %v777
    %v788 = vpop.f32.mrf.mxu0
    %v789 = vadd.f32 0.0, %v788
    %v790 = vpop.f32.mrf.mxu0
    %v791 = vadd.f32 0.0, %v790
    %792 = vdwg.mxu0
    %v793 = vadd.f32 %v754, %v789
    %v794 = vadd.f32 %v755, %v791
    %v795 = vpack.c.bf16 %v642, %v641
    %s796 = scalar_lea.vmem [#allocation6], 64
    %v797 = vld [vmem:[%s796] sm:$0xf]
    %v798 = vld [vmem:[%s796 + $0x4] sm:$0xf]
    %v799 = vld [vmem:[%s796 + $0x8] sm:$0xf]
    %v800 = vld [vmem:[%s796 + $0xc] sm:$0xf]
    %v805 = vunpack.c.l.b16 %v797
    %v806 = vunpack.c.l.b16 %v798
    %v807 = vunpack.c.l.b16 %v799
    %v808 = vunpack.c.l.b16 %v800
    %v809 = vpack.c.b16 %v806, %v805
    %v810 = vpack.c.b16 %v808, %v807
    %v814 = vsel %vm227, %v795, 0
    %816 = vmatpush.bf16.msra.mxu0 0
    %817 = vmatpush.bf16.msra.mxu0 0
    %818 = vmatpush.bf16.msra.mxu0 0
    %819 = vmatpush.bf16.msra.mxu0 0
    %820 = vmatpush.bf16.msra.mxu0 0
    %821 = vmatpush.bf16.msra.mxu0 0
    %822 = vmatpush.bf16.msra.mxu0 %v810
    %823 = vmatpush.bf16.msra.mxu0 %v809
    %824 = vmatmul.bf16.gmra.mxu0 %v814
    %v825 = vpop.f32.mrf.mxu0
    %v826 = vadd.f32 0.0, %v825
    %v827 = vpop.f32.mrf.mxu0
    %v828 = vadd.f32 0.0, %v827
    %829 = vdwg.mxu0
    %v830 = vadd.f32 %v793, %v826
    %v831 = vadd.f32 %v794, %v828
    %v832 = vld [vmem:[%s7] sm:$0x1]
    %v834 = vperm.slane %v832, 0
    %v836 = vadd.f32 %v830, %v834
    %v837 = vadd.f32 %v831, %v834
    %v838 = vmax.f32 %v836, 0.0
    %v839 = vmax.f32 %v837, 0.0
    %v840 = vpack.c.bf16 %v839, %v838
    %v841 = vld [vmem:[#allocation8] sm:$0xf]
    %v842 = vld [vmem:[#allocation8 + $0x4] sm:$0xf]
    %v843 = vld [vmem:[#allocation8 + $0x8] sm:$0xf]
    %v844 = vld [vmem:[#allocation8 + $0xc] sm:$0xf]
    %v845 = vld [vmem:[%s10] sm:$0x1]
    %v847 = vperm.slane %v845, 0
    %v853 = vunpack.c.l.b16 %v841
    %v854 = vunpack.c.l.b16 %v842
    %v855 = vunpack.c.l.b16 %v843
    %v856 = vunpack.c.l.b16 %v844
    %v857 = vpack.c.b16 %v854, %v853
    %v858 = vpack.c.b16 %v856, %v855
    %v862 = vsel %vm227, %v840, 0
    %864 = vmatpush.bf16.msra.mxu0 0
    %865 = vmatpush.bf16.msra.mxu0 0
    %866 = vmatpush.bf16.msra.mxu0 0
    %867 = vmatpush.bf16.msra.mxu0 0
    %868 = vmatpush.bf16.msra.mxu0 0
    %869 = vmatpush.bf16.msra.mxu0 0
    %870 = vmatpush.bf16.msra.mxu0 %v858
    %871 = vmatpush.bf16.msra.mxu0 %v857
    %872 = vmatmul.bf16.gmra.mxu0 %v862
    %v873 = vpop.f32.mrf.mxu0
    %v874 = vadd.f32 %v847, %v873
    %v875 = vpop.f32.mrf.mxu0
    %v876 = vadd.f32 %v847, %v875
    %877 = vdwg.mxu0
    %v878 = vld [vmem:[#allocation9] sm:$0xf]
    %v879 = vld [vmem:[#allocation9 + $0x4] sm:$0xf]
    %v880 = vld [vmem:[#allocation9 + $0x8] sm:$0xf]
    %v881 = vld [vmem:[#allocation9 + $0xc] sm:$0xf]
    %v886 = vunpack.c.l.b16 %v878
    %v887 = vunpack.c.l.b16 %v879
    %v888 = vunpack.c.l.b16 %v880
    %v889 = vunpack.c.l.b16 %v881
    %v890 = vpack.c.b16 %v887, %v886
    %v891 = vpack.c.b16 %v889, %v888
    %894 = vmatpush.bf16.msra.mxu0 0
    %895 = vmatpush.bf16.msra.mxu0 0
    %896 = vmatpush.bf16.msra.mxu0 0
    %897 = vmatpush.bf16.msra.mxu0 0
    %898 = vmatpush.bf16.msra.mxu0 0
    %899 = vmatpush.bf16.msra.mxu0 0
    %900 = vmatpush.bf16.msra.mxu0 %v891
    %901 = vmatpush.bf16.msra.mxu0 %v890
    %902 = vmatmul.bf16.gmra.mxu0 %v862
    %v903 = vpop.f32.mrf.mxu0
    %v904 = vadd.f32 0.0, %v903
    %v905 = vpop.f32.mrf.mxu0
    %v906 = vadd.f32 0.0, %v905
    %907 = vdwg.mxu0
    %v908 = vld [vmem:[#allocation11] sm:$0xff]
    %v909 = vld [vmem:[#allocation11 + $0x8] sm:$0xff]
    %v910 = vld [vmem:[#allocation11 + $0x10] sm:$0xff]
    %v911 = vld [vmem:[#allocation11 + $0x18] sm:$0xff]
    %v912 = vld [vmem:[#allocation12] sm:$0x1]
    %v914 = vrot.slane %v906, 6
    %v916 = vadd.f32 %v874, %v914
    %v918 = vperm.slane %v912, 0
    %v921 = vsel %vm227, 0.0, 0
    %923 = vmatpush.msra.mxu0 0.0
    %924 = vmatpush.msra.mxu0 0.0
    %925 = vmatpush.msra.mxu0 0.0
    %926 = vmatpush.msra.mxu0 0.0
    %927 = vmatpush.msra.mxu0 0.0
    %928 = vmatpush.msra.mxu0 0.0
    %929 = vmatpush.msra.mxu0 0.0
    %930 = vmatpush.msra.mxu0 0.0
    %931 = vmatpush.msra.mxu0 0.0
    %932 = vmatpush.msra.mxu0 0.0
    %933 = vmatpush.msra.mxu0 0.0
    %934 = vmatpush.msra.mxu0 0.0
    %935 = vmatpush.msra.mxu0 %v911
    %936 = vmatpush.msra.mxu0 %v910
    %937 = vmatpush.msra.mxu0 %v909
    %938 = vmatpush.msra.mxu0 %v908
    %939 = vmatmul.f32.gmra.mxu0 %v921
    %v940 = vpop.f32.mrf.mxu0
    %v941 = vadd.f32 %v918, %v940
    %942 = vdwg.mxu0
    %v943 = vadd.f32 %v916, %v941
    %v944 = vxor.u32 %v943, 2147483648
    %v945 = vmul.f32 %v944, 1.442695
    %v946 = vpow.pop %v945
    %v947 = vadd.f32 %v946, 1.0
    %v948 = vrcp.pop %v947
    %v949 = vmul.f32 %v947, %v948
    %v950 = vsub.f32 1.0, %v949
    %v951 = vmul.f32 %v948, %v950
    %v952 = vadd.f32 %v948, %v951
    %vm953 = vweird.f32 %v947
    %vm954 = vweird.f32 %v948
    %vm955 = vmor %vm953, %vm954
    %v956 = vsel %vm955, %v948, %v952
    %v957 = vand.u32 2147483647, %v947
    %vm958 = vcmp.eq.f32.partialorder %v957, 8.507059e+37
    %v959 = vand.u32 %v947, 2147483648
    %v960 = vor.u32 1.1754944e-38, %v959
    %v961 = vsel %vm958, %v960, %v956
    %v962 = vmul.f32 1.0, %v961
    %964 = vrot.lane.b32.xlu0 %v941, 64
    %v965 = vpop.permute.xlu0 %964
    %v967 = vmul.f32 %v962, %v965
    %969 = vrot.lane.b32.xlu0 %v967, 64
    %v970 = vpop.permute.xlu0 %969
    %v972 = vadd.f32 %v916, %v970
    %v973 = vtanh.pop %v972
    %v974 = vsub.f32 1.0, %v962
    %976 = vrot.lane.b32.xlu0 %v973, 96
    %v977 = vpop.permute.xlu0 %976
    %v979 = vmul.f32 %v974, %v977
    %v980 = vmul.f32 %v962, 0.0
    %v981 = vadd.f32 %v979, %v980
    %v983 = vrot.slane %v981, 1
    %v984 = vperm.slane %v981, 0
    %v985 = vperm.slane %v983, 0
    %986 = vrot.lane.b32.xlu0 %v984, 96
    %v987 = vpop.permute.xlu0 %986
    %988 = vrot.lane.b32.xlu0 %v985, 96
    %v989 = vpop.permute.xlu0 %988
    %vm992 = vcmask 122880
    %993 = vst.msk [vmem:[#allocation17] sm:$0x1] %vm992, %v987
    %994 = vst.msk [vmem:[#allocation17 + $0x8] sm:$0x1] %vm992, %v989
    %vm995 = vcmask 254080
    %996 = vst.msk [vmem:[#allocation17 + $0x7] sm:$0x1] %vm995, %v987
    %997 = vst.msk [vmem:[#allocation17 + $0xf] sm:$0x1] %vm995, %v989
    %v998 = vrot.slane %v906, 2
    %v1000 = vadd.f32 %v874, %v998
    %1001 = vrot.lane.b32.xlu0 %v981, 96
    %v1002 = vpop.permute.xlu0 %1001
    %v1003 = vsel %vm227, %v1002, 0
    %1005 = vmatpush.msra.mxu0 0.0
    %1006 = vmatpush.msra.mxu0 0.0
    %1007 = vmatpush.msra.mxu0 0.0
    %1008 = vmatpush.msra.mxu0 0.0
    %1009 = vmatpush.msra.mxu0 0.0
    %1010 = vmatpush.msra.mxu0 0.0
    %1011 = vmatpush.msra.mxu0 0.0
    %1012 = vmatpush.msra.mxu0 0.0
    %1013 = vmatpush.msra.mxu0 0.0
    %1014 = vmatpush.msra.mxu0 0.0
    %1015 = vmatpush.msra.mxu0 0.0
    %1016 = vmatpush.msra.mxu0 0.0
    %1017 = vmatpush.msra.mxu0 %v911
    %1018 = vmatpush.msra.mxu0 %v910
    %1019 = vmatpush.msra.mxu0 %v909
    %1020 = vmatpush.msra.mxu0 %v908
    %1021 = vmatmul.f32.gmra.mxu0 %v1003
    %v1022 = vpop.f32.mrf.mxu0
    %v1023 = vadd.f32 %v918, %v1022
    %1024 = vdwg.mxu0
    %v1026 = vrot.slane %v1023, 6
    %v1028 = vadd.f32 %v1000, %v1026
    %v1029 = vxor.u32 %v1028, 2147483648
    %v1030 = vmul.f32 %v1029, 1.442695
    %v1031 = vpow.pop %v1030
    %v1032 = vadd.f32 %v1031, 1.0
    %v1033 = vrcp.pop %v1032
    %v1034 = vmul.f32 %v1032, %v1033
    %v1035 = vsub.f32 1.0, %v1034
    %v1036 = vmul.f32 %v1033, %v1035
    %v1037 = vadd.f32 %v1033, %v1036
    %vm1038 = vweird.f32 %v1032
    %vm1039 = vweird.f32 %v1033
    %vm1040 = vmor %vm1038, %vm1039
    %v1041 = vsel %vm1040, %v1033, %v1037
    %v1042 = vand.u32 2147483647, %v1032
    %vm1043 = vcmp.eq.f32.partialorder %v1042, 8.507059e+37
    %v1044 = vand.u32 %v1032, 2147483648
    %v1045 = vor.u32 1.1754944e-38, %v1044
    %v1046 = vsel %vm1043, %v1045, %v1041
    %v1047 = vmul.f32 1.0, %v1046
    %1048 = vrot.lane.b32.xlu0 %v1026, 64
    %v1049 = vpop.permute.xlu0 %1048
    %v1051 = vmul.f32 %v1047, %v1049
    %1053 = vrot.lane.b32.xlu0 %v1051, 64
    %v1054 = vpop.permute.xlu0 %1053
    %v1056 = vadd.f32 %v1000, %v1054
    %v1057 = vtanh.pop %v1056
    %v1058 = vsub.f32 1.0, %v1047
    %1060 = vrot.lane.b32.xlu0 %v1057, 96
    %v1061 = vpop.permute.xlu0 %1060
    %v1063 = vmul.f32 %v1058, %v1061
    %v1064 = vrot.slane %v981, 6
    %v1066 = vmul.f32 %v1047, %v1064
    %v1067 = vadd.f32 %v1063, %v1066
    %1069 = vst [vmem:[#allocation1] sm:$0xff] %v1067
    %s1070 = scalar_lea.vmem [#allocation1], 2
    %v1071 = vld [vmem:[%s1070] ss:$9 sm:$0xff]
    %s1072 = scalar_lea.vmem [#allocation1], 3
    %v1073 = vld [vmem:[%s1072] ss:$9 sm:$0xff]
    %v1074 = vperm.slane %v1071, 0
    %v1075 = vperm.slane %v1073, 0
    %1076 = vrot.lane.b32.xlu0 %v1074, 96
    %v1077 = vpop.permute.xlu0 %1076
    %1078 = vrot.lane.b32.xlu0 %v1075, 96
    %v1079 = vpop.permute.xlu0 %1078
    %1082 = vst.msk [vmem:[#allocation17 + $0x1] sm:$0x1] %vm992, %v1077
    %1083 = vst.msk [vmem:[#allocation17 + $0x9] sm:$0x1] %vm992, %v1079
    %1084 = vst [vmem:[#allocation1] sm:$0xff] %v1067
    %s1085 = scalar_lea.vmem [#allocation1], 2
    %v1086 = vld [vmem:[%s1085] ss:$9 sm:$0xff]
    %s1087 = scalar_lea.vmem [#allocation1], 3
    %v1088 = vld [vmem:[%s1087] ss:$9 sm:$0xff]
    %v1089 = vperm.slane %v1086, 0
    %v1090 = vperm.slane %v1088, 0
    %1091 = vrot.lane.b32.xlu0 %v1089, 96
    %v1092 = vpop.permute.xlu0 %1091
    %1093 = vrot.lane.b32.xlu0 %v1090, 96
    %v1094 = vpop.permute.xlu0 %1093
    %1097 = vst.msk [vmem:[#allocation17 + $0x6] sm:$0x1] %vm995, %v1092
    %1098 = vst.msk [vmem:[#allocation17 + $0xe] sm:$0x1] %vm995, %v1094
    %v1099 = vrot.slane %v1067, 2
    %1100 = vrot.lane.b32.xlu0 %v1099, 96
    %v1101 = vpop.permute.xlu0 %1100
    %v1102 = vsel %vm227, %v1101, 0
    %1104 = vmatpush.msra.mxu0 0.0
    %1105 = vmatpush.msra.mxu0 0.0
    %1106 = vmatpush.msra.mxu0 0.0
    %1107 = vmatpush.msra.mxu0 0.0
    %1108 = vmatpush.msra.mxu0 0.0
    %1109 = vmatpush.msra.mxu0 0.0
    %1110 = vmatpush.msra.mxu0 0.0
    %1111 = vmatpush.msra.mxu0 0.0
    %1112 = vmatpush.msra.mxu0 0.0
    %1113 = vmatpush.msra.mxu0 0.0
    %1114 = vmatpush.msra.mxu0 0.0
    %1115 = vmatpush.msra.mxu0 0.0
    %1116 = vmatpush.msra.mxu0 %v911
    %1117 = vmatpush.msra.mxu0 %v910
    %1118 = vmatpush.msra.mxu0 %v909
    %1119 = vmatpush.msra.mxu0 %v908
    %1120 = vmatmul.f32.gmra.mxu0 %v1102
    %v1121 = vpop.f32.mrf.mxu0
    %v1122 = vadd.f32 %v918, %v1121
    %1123 = vdwg.mxu0
    %v1125 = vrot.slane %v1122, 4
    %v1127 = vadd.f32 %v916, %v1125
    %v1128 = vxor.u32 %v1127, 2147483648
    %v1129 = vmul.f32 %v1128, 1.442695
    %v1130 = vpow.pop %v1129
    %v1131 = vadd.f32 %v1130, 1.0
    %v1132 = vrcp.pop %v1131
    %v1133 = vmul.f32 %v1131, %v1132
    %v1134 = vsub.f32 1.0, %v1133
    %v1135 = vmul.f32 %v1132, %v1134
    %v1136 = vadd.f32 %v1132, %v1135
    %vm1137 = vweird.f32 %v1131
    %vm1138 = vweird.f32 %v1132
    %vm1139 = vmor %vm1137, %vm1138
    %v1140 = vsel %vm1139, %v1132, %v1136
    %v1141 = vand.u32 2147483647, %v1131
    %vm1142 = vcmp.eq.f32.partialorder %v1141, 8.507059e+37
    %v1143 = vand.u32 %v1131, 2147483648
    %v1144 = vor.u32 1.1754944e-38, %v1143
    %v1145 = vsel %vm1142, %v1144, %v1140
    %v1146 = vmul.f32 1.0, %v1145
    %1147 = vrot.lane.b32.xlu0 %v1125, 64
    %v1148 = vpop.permute.xlu0 %1147
    %v1150 = vmul.f32 %v1146, %v1148
    %1152 = vrot.lane.b32.xlu0 %v1150, 64
    %v1153 = vpop.permute.xlu0 %1152
    %v1155 = vadd.f32 %v916, %v1153
    %v1156 = vtanh.pop %v1155
    %v1157 = vsub.f32 1.0, %v1146
    %1159 = vrot.lane.b32.xlu0 %v1156, 96
    %v1160 = vpop.permute.xlu0 %1159
    %v1162 = vmul.f32 %v1157, %v1160
    %v1163 = vrot.slane %v1067, 6
    %v1165 = vmul.f32 %v1146, %v1163
    %v1166 = vadd.f32 %v1162, %v1165
    %1168 = vst [vmem:[#allocation1] sm:$0xff] %v1166
    %s1169 = scalar_lea.vmem [#allocation1], 4
    %v1170 = vld [vmem:[%s1169] ss:$9 sm:$0xff]
    %s1171 = scalar_lea.vmem [#allocation1], 5
    %v1172 = vld [vmem:[%s1171] ss:$9 sm:$0xff]
    %v1173 = vperm.slane %v1170, 0
    %v1174 = vperm.slane %v1172, 0
    %1175 = vrot.lane.b32.xlu0 %v1173, 96
    %v1176 = vpop.permute.xlu0 %1175
    %1177 = vrot.lane.b32.xlu0 %v1174, 96
    %v1178 = vpop.permute.xlu0 %1177
    %1181 = vst.msk [vmem:[#allocation17 + $0x2] sm:$0x1] %vm992, %v1176
    %1182 = vst.msk [vmem:[#allocation17 + $0xa] sm:$0x1] %vm992, %v1178
    %1183 = vst [vmem:[#allocation1] sm:$0xff] %v1166
    %s1184 = scalar_lea.vmem [#allocation1], 4
    %v1185 = vld [vmem:[%s1184] ss:$9 sm:$0xff]
    %s1186 = scalar_lea.vmem [#allocation1], 5
    %v1187 = vld [vmem:[%s1186] ss:$9 sm:$0xff]
    %v1188 = vperm.slane %v1185, 0
    %v1189 = vperm.slane %v1187, 0
    %1190 = vrot.lane.b32.xlu0 %v1188, 96
    %v1191 = vpop.permute.xlu0 %1190
    %1192 = vrot.lane.b32.xlu0 %v1189, 96
    %v1193 = vpop.permute.xlu0 %1192
    %1196 = vst.msk [vmem:[#allocation17 + $0x5] sm:$0x1] %vm995, %v1191
    %1197 = vst.msk [vmem:[#allocation17 + $0xd] sm:$0x1] %vm995, %v1193
    %v1198 = vrot.slane %v1166, 4
    %1199 = vrot.lane.b32.xlu0 %v1198, 96
    %v1200 = vpop.permute.xlu0 %1199
    %v1201 = vsel %vm227, %v1200, 0
    %1203 = vmatpush.msra.mxu0 0.0
    %1204 = vmatpush.msra.mxu0 0.0
    %1205 = vmatpush.msra.mxu0 0.0
    %1206 = vmatpush.msra.mxu0 0.0
    %1207 = vmatpush.msra.mxu0 0.0
    %1208 = vmatpush.msra.mxu0 0.0
    %1209 = vmatpush.msra.mxu0 0.0
    %1210 = vmatpush.msra.mxu0 0.0
    %1211 = vmatpush.msra.mxu0 0.0
    %1212 = vmatpush.msra.mxu0 0.0
    %1213 = vmatpush.msra.mxu0 0.0
    %1214 = vmatpush.msra.mxu0 0.0
    %1215 = vmatpush.msra.mxu0 %v911
    %1216 = vmatpush.msra.mxu0 %v910
    %1217 = vmatpush.msra.mxu0 %v909
    %1218 = vmatpush.msra.mxu0 %v908
    %1219 = vmatmul.f32.gmra.mxu0 %v1201
    %v1220 = vpop.f32.mrf.mxu0
    %v1221 = vadd.f32 %v918, %v1220
    %1222 = vdwg.mxu0
    %v1224 = vrot.slane %v1221, 2
    %v1226 = vadd.f32 %v1000, %v1224
    %v1227 = vxor.u32 %v1226, 2147483648
    %v1228 = vmul.f32 %v1227, 1.442695
    %v1229 = vpow.pop %v1228
    %v1230 = vadd.f32 %v1229, 1.0
    %v1231 = vrcp.pop %v1230
    %v1232 = vmul.f32 %v1230, %v1231
    %v1233 = vsub.f32 1.0, %v1232
    %v1234 = vmul.f32 %v1231, %v1233
    %v1235 = vadd.f32 %v1231, %v1234
    %vm1236 = vweird.f32 %v1230
    %vm1237 = vweird.f32 %v1231
    %vm1238 = vmor %vm1236, %vm1237
    %v1239 = vsel %vm1238, %v1231, %v1235
    %v1240 = vand.u32 2147483647, %v1230
    %vm1241 = vcmp.eq.f32.partialorder %v1240, 8.507059e+37
    %v1242 = vand.u32 %v1230, 2147483648
    %v1243 = vor.u32 1.1754944e-38, %v1242
    %v1244 = vsel %vm1241, %v1243, %v1239
    %v1245 = vmul.f32 1.0, %v1244
    %1246 = vrot.lane.b32.xlu0 %v1224, 64
    %v1247 = vpop.permute.xlu0 %1246
    %v1249 = vmul.f32 %v1245, %v1247
    %1251 = vrot.lane.b32.xlu0 %v1249, 64
    %v1252 = vpop.permute.xlu0 %1251
    %v1254 = vadd.f32 %v1000, %v1252
    %v1255 = vtanh.pop %v1254
    %v1256 = vsub.f32 1.0, %v1245
    %1258 = vrot.lane.b32.xlu0 %v1255, 96
    %v1259 = vpop.permute.xlu0 %1258
    %v1261 = vmul.f32 %v1256, %v1259
    %v1262 = vrot.slane %v1166, 6
    %v1264 = vmul.f32 %v1245, %v1262
    %v1265 = vadd.f32 %v1261, %v1264
    %1267 = vst [vmem:[#allocation1] sm:$0xff] %v1265
    %s1268 = scalar_lea.vmem [#allocation1], 6
    %v1269 = vld [vmem:[%s1268] ss:$9 sm:$0xff]
    %s1270 = scalar_lea.vmem [#allocation1], 7
    %v1271 = vld [vmem:[%s1270] ss:$9 sm:$0xff]
    %v1272 = vperm.slane %v1269, 0
    %v1273 = vperm.slane %v1271, 0
    %1274 = vrot.lane.b32.xlu0 %v1272, 96
    %v1275 = vpop.permute.xlu0 %1274
    %1276 = vrot.lane.b32.xlu0 %v1273, 96
    %v1277 = vpop.permute.xlu0 %1276
    %1280 = vst.msk [vmem:[#allocation17 + $0x3] sm:$0x1] %vm992, %v1275
    %1281 = vst.msk [vmem:[#allocation17 + $0xb] sm:$0x1] %vm992, %v1277
    %1282 = vst [vmem:[#allocation1] sm:$0xff] %v1265
    %s1283 = scalar_lea.vmem [#allocation1], 6
    %v1284 = vld [vmem:[%s1283] ss:$9 sm:$0xff]
    %s1285 = scalar_lea.vmem [#allocation1], 7
    %v1286 = vld [vmem:[%s1285] ss:$9 sm:$0xff]
    %v1287 = vperm.slane %v1284, 0
    %v1288 = vperm.slane %v1286, 0
    %1289 = vrot.lane.b32.xlu0 %v1287, 96
    %v1290 = vpop.permute.xlu0 %1289
    %1291 = vrot.lane.b32.xlu0 %v1288, 96
    %v1292 = vpop.permute.xlu0 %1291
    %1295 = vst.msk [vmem:[#allocation17 + $0x4] sm:$0x1] %vm995, %v1290
    %1296 = vst.msk [vmem:[#allocation17 + $0xc] sm:$0x1] %vm995, %v1292
    %v1298 = vrot.slane %v904, 6
    %v1300 = vadd.f32 %v876, %v1298
    %v1301 = vrot.slane %v1265, 6
    %1302 = vrot.lane.b32.xlu0 %v1301, 96
    %v1303 = vpop.permute.xlu0 %1302
    %v1304 = vsel %vm227, %v1303, 0
    %1306 = vmatpush.msra.mxu0 0.0
    %1307 = vmatpush.msra.mxu0 0.0
    %1308 = vmatpush.msra.mxu0 0.0
    %1309 = vmatpush.msra.mxu0 0.0
    %1310 = vmatpush.msra.mxu0 0.0
    %1311 = vmatpush.msra.mxu0 0.0
    %1312 = vmatpush.msra.mxu0 0.0
    %1313 = vmatpush.msra.mxu0 0.0
    %1314 = vmatpush.msra.mxu0 0.0
    %1315 = vmatpush.msra.mxu0 0.0
    %1316 = vmatpush.msra.mxu0 0.0
    %1317 = vmatpush.msra.mxu0 0.0
    %1318 = vmatpush.msra.mxu0 %v911
    %1319 = vmatpush.msra.mxu0 %v910
    %1320 = vmatpush.msra.mxu0 %v909
    %1321 = vmatpush.msra.mxu0 %v908
    %1322 = vmatmul.f32.gmra.mxu0 %v1304
    %v1323 = vpop.f32.mrf.mxu0
    %v1324 = vadd.f32 %v918, %v1323
    %1325 = vdwg.mxu0
    %v1326 = vadd.f32 %v1300, %v1324
    %v1327 = vxor.u32 %v1326, 2147483648
    %v1328 = vmul.f32 %v1327, 1.442695
    %v1329 = vpow.pop %v1328
    %v1330 = vadd.f32 %v1329, 1.0
    %v1331 = vrcp.pop %v1330
    %v1332 = vmul.f32 %v1330, %v1331
    %v1333 = vsub.f32 1.0, %v1332
    %v1334 = vmul.f32 %v1331, %v1333
    %v1335 = vadd.f32 %v1331, %v1334
    %vm1336 = vweird.f32 %v1330
    %vm1337 = vweird.f32 %v1331
    %vm1338 = vmor %vm1336, %vm1337
    %v1339 = vsel %vm1338, %v1331, %v1335
    %v1340 = vand.u32 2147483647, %v1330
    %vm1341 = vcmp.eq.f32.partialorder %v1340, 8.507059e+37
    %v1342 = vand.u32 %v1330, 2147483648
    %v1343 = vor.u32 1.1754944e-38, %v1342
    %v1344 = vsel %vm1341, %v1343, %v1339
    %v1345 = vmul.f32 1.0, %v1344
    %1347 = vrot.lane.b32.xlu0 %v1324, 64
    %v1348 = vpop.permute.xlu0 %1347
    %v1350 = vmul.f32 %v1345, %v1348
    %1352 = vrot.lane.b32.xlu0 %v1350, 64
    %v1353 = vpop.permute.xlu0 %1352
    %v1355 = vadd.f32 %v1300, %v1353
    %v1356 = vtanh.pop %v1355
    %v1357 = vsub.f32 1.0, %v1345
    %1359 = vrot.lane.b32.xlu0 %v1356, 96
    %v1360 = vpop.permute.xlu0 %1359
    %v1362 = vmul.f32 %v1357, %v1360
    %v1364 = vmul.f32 %v1345, %v1301
    %v1365 = vadd.f32 %v1362, %v1364
    %v1367 = vrot.slane %v1365, 1
    %v1368 = vperm.slane %v1365, 0
    %v1369 = vperm.slane %v1367, 0
    %1370 = vrot.lane.b32.xlu0 %v1368, 96
    %v1371 = vpop.permute.xlu0 %1370
    %1372 = vrot.lane.b32.xlu0 %v1369, 96
    %v1373 = vpop.permute.xlu0 %1372
    %1376 = vst.msk [vmem:[#allocation17 + $0x4] sm:$0x1] %vm992, %v1371
    %1377 = vst.msk [vmem:[#allocation17 + $0xc] sm:$0x1] %vm992, %v1373
    %1378 = vst.msk [vmem:[#allocation17 + $0x3] sm:$0x1] %vm995, %v1371
    %1379 = vst.msk [vmem:[#allocation17 + $0xb] sm:$0x1] %vm995, %v1373
    %v1380 = vrot.slane %v904, 2
    %v1382 = vadd.f32 %v876, %v1380
    %1383 = vrot.lane.b32.xlu0 %v1365, 96
    %v1384 = vpop.permute.xlu0 %1383
    %v1385 = vsel %vm227, %v1384, 0
    %1387 = vmatpush.msra.mxu0 0.0
    %1388 = vmatpush.msra.mxu0 0.0
    %1389 = vmatpush.msra.mxu0 0.0
    %1390 = vmatpush.msra.mxu0 0.0
    %1391 = vmatpush.msra.mxu0 0.0
    %1392 = vmatpush.msra.mxu0 0.0
    %1393 = vmatpush.msra.mxu0 0.0
    %1394 = vmatpush.msra.mxu0 0.0
    %1395 = vmatpush.msra.mxu0 0.0
    %1396 = vmatpush.msra.mxu0 0.0
    %1397 = vmatpush.msra.mxu0 0.0
    %1398 = vmatpush.msra.mxu0 0.0
    %1399 = vmatpush.msra.mxu0 %v911
    %1400 = vmatpush.msra.mxu0 %v910
    %1401 = vmatpush.msra.mxu0 %v909
    %1402 = vmatpush.msra.mxu0 %v908
    %1403 = vmatmul.f32.gmra.mxu0 %v1385
    %v1404 = vpop.f32.mrf.mxu0
    %v1405 = vadd.f32 %v918, %v1404
    %1406 = vdwg.mxu0
    %v1408 = vrot.slane %v1405, 6
    %v1410 = vadd.f32 %v1382, %v1408
    %v1411 = vxor.u32 %v1410, 2147483648
    %v1412 = vmul.f32 %v1411, 1.442695
    %v1413 = vpow.pop %v1412
    %v1414 = vadd.f32 %v1413, 1.0
    %v1415 = vrcp.pop %v1414
    %v1416 = vmul.f32 %v1414, %v1415
    %v1417 = vsub.f32 1.0, %v1416
    %v1418 = vmul.f32 %v1415, %v1417
    %v1419 = vadd.f32 %v1415, %v1418
    %vm1420 = vweird.f32 %v1414
    %vm1421 = vweird.f32 %v1415
    %vm1422 = vmor %vm1420, %vm1421
    %v1423 = vsel %vm1422, %v1415, %v1419
    %v1424 = vand.u32 2147483647, %v1414
    %vm1425 = vcmp.eq.f32.partialorder %v1424, 8.507059e+37
    %v1426 = vand.u32 %v1414, 2147483648
    %v1427 = vor.u32 1.1754944e-38, %v1426
    %v1428 = vsel %vm1425, %v1427, %v1423
    %v1429 = vmul.f32 1.0, %v1428
    %1430 = vrot.lane.b32.xlu0 %v1408, 64
    %v1431 = vpop.permute.xlu0 %1430
    %v1433 = vmul.f32 %v1429, %v1431
    %1435 = vrot.lane.b32.xlu0 %v1433, 64
    %v1436 = vpop.permute.xlu0 %1435
    %v1438 = vadd.f32 %v1382, %v1436
    %v1439 = vtanh.pop %v1438
    %v1440 = vsub.f32 1.0, %v1429
    %1442 = vrot.lane.b32.xlu0 %v1439, 96
    %v1443 = vpop.permute.xlu0 %1442
    %v1445 = vmul.f32 %v1440, %v1443
    %v1446 = vrot.slane %v1365, 6
    %v1448 = vmul.f32 %v1429, %v1446
    %v1449 = vadd.f32 %v1445, %v1448
    %1451 = vst [vmem:[#allocation1] sm:$0xff] %v1449
    %s1452 = scalar_lea.vmem [#allocation1], 2
    %v1453 = vld [vmem:[%s1452] ss:$9 sm:$0xff]
    %s1454 = scalar_lea.vmem [#allocation1], 3
    %v1455 = vld [vmem:[%s1454] ss:$9 sm:$0xff]
    %v1456 = vperm.slane %v1453, 0
    %v1457 = vperm.slane %v1455, 0
    %1458 = vrot.lane.b32.xlu0 %v1456, 96
    %v1459 = vpop.permute.xlu0 %1458
    %1460 = vrot.lane.b32.xlu0 %v1457, 96
    %v1461 = vpop.permute.xlu0 %1460
    %1464 = vst.msk [vmem:[#allocation17 + $0x5] sm:$0x1] %vm992, %v1459
    %1465 = vst.msk [vmem:[#allocation17 + $0xd] sm:$0x1] %vm992, %v1461
    %1466 = vst [vmem:[#allocation1] sm:$0xff] %v1449
    %s1467 = scalar_lea.vmem [#allocation1], 2
    %v1468 = vld [vmem:[%s1467] ss:$9 sm:$0xff]
    %s1469 = scalar_lea.vmem [#allocation1], 3
    %v1470 = vld [vmem:[%s1469] ss:$9 sm:$0xff]
    %v1471 = vperm.slane %v1468, 0
    %v1472 = vperm.slane %v1470, 0
    %1473 = vrot.lane.b32.xlu0 %v1471, 96
    %v1474 = vpop.permute.xlu0 %1473
    %1475 = vrot.lane.b32.xlu0 %v1472, 96
    %v1476 = vpop.permute.xlu0 %1475
    %1479 = vst.msk [vmem:[#allocation17 + $0x2] sm:$0x1] %vm995, %v1474
    %1480 = vst.msk [vmem:[#allocation17 + $0xa] sm:$0x1] %vm995, %v1476
    %v1481 = vrot.slane %v1449, 2
    %1482 = vrot.lane.b32.xlu0 %v1481, 96
    %v1483 = vpop.permute.xlu0 %1482
    %v1484 = vsel %vm227, %v1483, 0
    %1486 = vmatpush.msra.mxu0 0.0
    %1487 = vmatpush.msra.mxu0 0.0
    %1488 = vmatpush.msra.mxu0 0.0
    %1489 = vmatpush.msra.mxu0 0.0
    %1490 = vmatpush.msra.mxu0 0.0
    %1491 = vmatpush.msra.mxu0 0.0
    %1492 = vmatpush.msra.mxu0 0.0
    %1493 = vmatpush.msra.mxu0 0.0
    %1494 = vmatpush.msra.mxu0 0.0
    %1495 = vmatpush.msra.mxu0 0.0
    %1496 = vmatpush.msra.mxu0 0.0
    %1497 = vmatpush.msra.mxu0 0.0
    %1498 = vmatpush.msra.mxu0 %v911
    %1499 = vmatpush.msra.mxu0 %v910
    %1500 = vmatpush.msra.mxu0 %v909
    %1501 = vmatpush.msra.mxu0 %v908
    %1502 = vmatmul.f32.gmra.mxu0 %v1484
    %v1503 = vpop.f32.mrf.mxu0
    %v1504 = vadd.f32 %v918, %v1503
    %1505 = vdwg.mxu0
    %v1507 = vrot.slane %v1504, 4
    %v1509 = vadd.f32 %v1300, %v1507
    %v1510 = vxor.u32 %v1509, 2147483648
    %v1511 = vmul.f32 %v1510, 1.442695
    %v1512 = vpow.pop %v1511
    %v1513 = vadd.f32 %v1512, 1.0
    %v1514 = vrcp.pop %v1513
    %v1515 = vmul.f32 %v1513, %v1514
    %v1516 = vsub.f32 1.0, %v1515
    %v1517 = vmul.f32 %v1514, %v1516
    %v1518 = vadd.f32 %v1514, %v1517
    %vm1519 = vweird.f32 %v1513
    %vm1520 = vweird.f32 %v1514
    %vm1521 = vmor %vm1519, %vm1520
    %v1522 = vsel %vm1521, %v1514, %v1518
    %v1523 = vand.u32 2147483647, %v1513
    %vm1524 = vcmp.eq.f32.partialorder %v1523, 8.507059e+37
    %v1525 = vand.u32 %v1513, 2147483648
    %v1526 = vor.u32 1.1754944e-38, %v1525
    %v1527 = vsel %vm1524, %v1526, %v1522
    %v1528 = vmul.f32 1.0, %v1527
    %1529 = vrot.lane.b32.xlu0 %v1507, 64
    %v1530 = vpop.permute.xlu0 %1529
    %v1532 = vmul.f32 %v1528, %v1530
    %1534 = vrot.lane.b32.xlu0 %v1532, 64
    %v1535 = vpop.permute.xlu0 %1534
    %v1537 = vadd.f32 %v1300, %v1535
    %v1538 = vtanh.pop %v1537
    %v1539 = vsub.f32 1.0, %v1528
    %1541 = vrot.lane.b32.xlu0 %v1538, 96
    %v1542 = vpop.permute.xlu0 %1541
    %v1544 = vmul.f32 %v1539, %v1542
    %v1545 = vrot.slane %v1449, 6
    %v1547 = vmul.f32 %v1528, %v1545
    %v1548 = vadd.f32 %v1544, %v1547
    %1550 = vst [vmem:[#allocation1] sm:$0xff] %v1548
    %s1551 = scalar_lea.vmem [#allocation1], 4
    %v1552 = vld [vmem:[%s1551] ss:$9 sm:$0xff]
    %s1553 = scalar_lea.vmem [#allocation1], 5
    %v1554 = vld [vmem:[%s1553] ss:$9 sm:$0xff]
    %v1555 = vperm.slane %v1552, 0
    %v1556 = vperm.slane %v1554, 0
    %1557 = vrot.lane.b32.xlu0 %v1555, 96
    %v1558 = vpop.permute.xlu0 %1557
    %1559 = vrot.lane.b32.xlu0 %v1556, 96
    %v1560 = vpop.permute.xlu0 %1559
    %1563 = vst.msk [vmem:[#allocation17 + $0x6] sm:$0x1] %vm992, %v1558
    %1564 = vst.msk [vmem:[#allocation17 + $0xe] sm:$0x1] %vm992, %v1560
    %1565 = vst [vmem:[#allocation1] sm:$0xff] %v1548
    %s1566 = scalar_lea.vmem [#allocation1], 4
    %v1567 = vld [vmem:[%s1566] ss:$9 sm:$0xff]
    %s1568 = scalar_lea.vmem [#allocation1], 5
    %v1569 = vld [vmem:[%s1568] ss:$9 sm:$0xff]
    %v1570 = vperm.slane %v1567, 0
    %v1571 = vperm.slane %v1569, 0
    %1572 = vrot.lane.b32.xlu0 %v1570, 96
    %v1573 = vpop.permute.xlu0 %1572
    %1574 = vrot.lane.b32.xlu0 %v1571, 96
    %v1575 = vpop.permute.xlu0 %1574
    %1578 = vst.msk [vmem:[#allocation17 + $0x1] sm:$0x1] %vm995, %v1573
    %1579 = vst.msk [vmem:[#allocation17 + $0x9] sm:$0x1] %vm995, %v1575
    %v1580 = vrot.slane %v1548, 4
    %1581 = vrot.lane.b32.xlu0 %v1580, 96
    %v1582 = vpop.permute.xlu0 %1581
    %v1583 = vsel %vm227, %v1582, 0
    %1585 = vmatpush.msra.mxu0 0.0
    %1586 = vmatpush.msra.mxu0 0.0
    %1587 = vmatpush.msra.mxu0 0.0
    %1588 = vmatpush.msra.mxu0 0.0
    %1589 = vmatpush.msra.mxu0 0.0
    %1590 = vmatpush.msra.mxu0 0.0
    %1591 = vmatpush.msra.mxu0 0.0
    %1592 = vmatpush.msra.mxu0 0.0
    %1593 = vmatpush.msra.mxu0 0.0
    %1594 = vmatpush.msra.mxu0 0.0
    %1595 = vmatpush.msra.mxu0 0.0
    %1596 = vmatpush.msra.mxu0 0.0
    %1597 = vmatpush.msra.mxu0 %v911
    %1598 = vmatpush.msra.mxu0 %v910
    %1599 = vmatpush.msra.mxu0 %v909
    %1600 = vmatpush.msra.mxu0 %v908
    %1601 = vmatmul.f32.gmra.mxu0 %v1583
    %v1602 = vpop.f32.mrf.mxu0
    %v1603 = vadd.f32 %v918, %v1602
    %1604 = vdwg.mxu0
    %v1606 = vrot.slane %v1603, 2
    %v1608 = vadd.f32 %v1382, %v1606
    %v1609 = vxor.u32 %v1608, 2147483648
    %v1610 = vmul.f32 %v1609, 1.442695
    %v1611 = vpow.pop %v1610
    %v1612 = vadd.f32 %v1611, 1.0
    %v1613 = vrcp.pop %v1612
    %v1614 = vmul.f32 %v1612, %v1613
    %v1615 = vsub.f32 1.0, %v1614
    %v1616 = vmul.f32 %v1613, %v1615
    %v1617 = vadd.f32 %v1613, %v1616
    %vm1618 = vweird.f32 %v1612
    %vm1619 = vweird.f32 %v1613
    %vm1620 = vmor %vm1618, %vm1619
    %v1621 = vsel %vm1620, %v1613, %v1617
    %v1622 = vand.u32 2147483647, %v1612
    %vm1623 = vcmp.eq.f32.partialorder %v1622, 8.507059e+37
    %v1624 = vand.u32 %v1612, 2147483648
    %v1625 = vor.u32 1.1754944e-38, %v1624
    %v1626 = vsel %vm1623, %v1625, %v1621
    %v1627 = vmul.f32 1.0, %v1626
    %1628 = vrot.lane.b32.xlu0 %v1606, 64
    %v1629 = vpop.permute.xlu0 %1628
    %v1631 = vmul.f32 %v1627, %v1629
    %1633 = vrot.lane.b32.xlu0 %v1631, 64
    %v1634 = vpop.permute.xlu0 %1633
    %v1636 = vadd.f32 %v1382, %v1634
    %v1637 = vtanh.pop %v1636
    %v1638 = vsub.f32 1.0, %v1627
    %1640 = vrot.lane.b32.xlu0 %v1637, 96
    %v1641 = vpop.permute.xlu0 %1640
    %v1643 = vmul.f32 %v1638, %v1641
    %v1644 = vrot.slane %v1548, 6
    %v1646 = vmul.f32 %v1627, %v1644
    %v1647 = vadd.f32 %v1643, %v1646
    %1649 = vst [vmem:[#allocation1] sm:$0xff] %v1647
    %s1650 = scalar_lea.vmem [#allocation1], 6
    %v1651 = vld [vmem:[%s1650] ss:$9 sm:$0xff]
    %s1652 = scalar_lea.vmem [#allocation1], 7
    %v1653 = vld [vmem:[%s1652] ss:$9 sm:$0xff]
    %v1654 = vperm.slane %v1651, 0
    %v1655 = vperm.slane %v1653, 0
    %1656 = vrot.lane.b32.xlu0 %v1654, 96
    %v1657 = vpop.permute.xlu0 %1656
    %1658 = vrot.lane.b32.xlu0 %v1655, 96
    %v1659 = vpop.permute.xlu0 %1658
    %1662 = vst.msk [vmem:[#allocation17 + $0x7] sm:$0x1] %vm992, %v1657
    %1663 = vst.msk [vmem:[#allocation17 + $0xf] sm:$0x1] %vm992, %v1659
    %1664 = vst [vmem:[#allocation1] sm:$0xff] %v1647
    %s1665 = scalar_lea.vmem [#allocation1], 6
    %v1666 = vld [vmem:[%s1665] ss:$9 sm:$0xff]
    %s1667 = scalar_lea.vmem [#allocation1], 7
    %v1668 = vld [vmem:[%s1667] ss:$9 sm:$0xff]
    %v1669 = vperm.slane %v1666, 0
    %v1670 = vperm.slane %v1668, 0
    %1671 = vrot.lane.b32.xlu0 %v1669, 96
    %v1672 = vpop.permute.xlu0 %1671
    %1673 = vrot.lane.b32.xlu0 %v1670, 96
    %v1674 = vpop.permute.xlu0 %1673
    %1677 = vst.msk [vmem:[#allocation17] sm:$0x1] %vm995, %v1672
    %1678 = vst.msk [vmem:[#allocation17 + $0x8] sm:$0x1] %vm995, %v1674
    %v1679 = vld [vmem:[#allocation14] sm:$0xff]
    %v1680 = vld [vmem:[#allocation14 + $0x8] sm:$0xff]
    %v1681 = vld [vmem:[#allocation14 + $0x10] sm:$0xff]
    %v1682 = vld [vmem:[#allocation14 + $0x18] sm:$0xff]
    %v1683 = vld [vmem:[#allocation15] sm:$0x1]
    %v1685 = vperm.slane %v1683, 0
    %v1687 = vrot.slane %v1647, 6
    %1688 = vrot.lane.b32.xlu0 %v1687, 96
    %v1689 = vpop.permute.xlu0 %1688
    %v1690 = vsel %vm227, %v1689, 0
    %1692 = vmatpush.msra.mxu0 0.0
    %1693 = vmatpush.msra.mxu0 0.0
    %1694 = vmatpush.msra.mxu0 0.0
    %1695 = vmatpush.msra.mxu0 0.0
    %1696 = vmatpush.msra.mxu0 0.0
    %1697 = vmatpush.msra.mxu0 0.0
    %1698 = vmatpush.msra.mxu0 0.0
    %1699 = vmatpush.msra.mxu0 0.0
    %1700 = vmatpush.msra.mxu0 0.0
    %1701 = vmatpush.msra.mxu0 0.0
    %1702 = vmatpush.msra.mxu0 0.0
    %1703 = vmatpush.msra.mxu0 0.0
    %1704 = vmatpush.msra.mxu0 %v1682
    %1705 = vmatpush.msra.mxu0 %v1681
    %1706 = vmatpush.msra.mxu0 %v1680
    %1707 = vmatpush.msra.mxu0 %v1679
    %1708 = vmatmul.f32.gmra.mxu0 %v1690
    %v1709 = vpop.f32.mrf.mxu0
    %v1710 = vadd.f32 %v1685, %v1709
    %1711 = vdwg.mxu0
    %v1712 = vtanh.pop %v1710
    %vm1713 = vcmask 254976
    %1714 = vst.msk [vmem:[#allocation18] sm:$0x3] %vm1713, %v1712
    // Predicated region
    $region94: #{encoder_forward.1} parent=1 // pred_check
      _
    $region95: #{encoder_forward.1} parent=1 // pred_check_branch
      %1716 = sbr.rel (0) target = $region97
    $region96: #{encoder_forward.1} parent=1 // pred_region
      %1718 = vsyncadd [#allocation5], 0
      %s1719 = sshll.u32 [#allocation17], 4
      %s1720 = int_to_ptr.vmem [resolvable:$true] %s1719
      %s1721 = sshll.u32 %s15, 4
      %s1722 = int_to_ptr.hbm [resolvable:$true] %s1721
      %1727 = dma.vmem_to_hbm [thread:$0]  %s1720, 256, %s1722, [#allocation5], 128, 128, 8
    $region97: #{encoder_forward.1} parent=1 // pred_fallthru
      _
    // Predicated region
    $region98: #{encoder_forward.1} parent=1 // pred_check
      _
    $region99: #{encoder_forward.1} parent=1 // pred_check_branch
      %1729 = sbr.rel (0) target = $region101
    $region100: #{encoder_forward.1} parent=1 // pred_region
      %1731 = vsyncadd [#allocation19], 0
      %s1733 = sshll.u32 [#allocation18], 4
      %s1734 = int_to_ptr.vmem [resolvable:$true] %s1733
      %s1735 = sshll.u32 %s16, 4
      %s1736 = int_to_ptr.hbm [resolvable:$true] %s1735
      %1738 = dma.vmem_to_hbm [thread:$0]  %s1734, 32, %s1736, [#allocation19]
    $region101: #{encoder_forward.1} parent=1 // pred_fallthru
      _
    // Predicated region
    $region102: #{encoder_forward.1} parent=1 // pred_check
      _
    $region103: #{encoder_forward.1} parent=1 // pred_check_branch
      %1740 = sbr.rel (0) target = $region105
    $region104: #{encoder_forward.1} parent=1 // pred_region
      %1742 = dma.done [#allocation5], 256
    $region105: #{encoder_forward.1} parent=1 // pred_fallthru
      _
    // Predicated region
    $region106: #{encoder_forward.1} parent=1 // pred_check
      _
    $region107: #{encoder_forward.1} parent=1 // pred_check_branch
      %1744 = sbr.rel (0) target = $region109
    $region108: #{encoder_forward.1} parent=1 // pred_region
      %1746 = dma.done [#allocation19], 32
    $region109: #{encoder_forward.1} parent=1 // pred_fallthru
      _
    %1747 = vsyncpa [#allocation4], 1
    %1748 = vsyncpa [#allocation7], 1
    %1749 = vsyncpa [#allocation10], 1
    %1750 = vsyncpa [#allocation13], 1
    %1751 = vsyncpa [#allocation16], 1
    %1752 = vsyncpa [#allocation5], 1
    %1753 = vsyncpa [#allocation19], 1

</llo_original>
